<compile_context>
chip_gen: v6e
topology: v6e:2x2x1
jax: 0.10.0
libtpu: 0.0.40
codegen_flags: <defaults>
</compile_context>

<pallas_src>
import jax
import jax.numpy as jnp
from jax import lax
from jax.experimental import pallas as pl
from jax.experimental.pallas import tpu as pltpu


# ----------------------------------------------------------------------------
# Fused kernel: shutter reduction + tree conv (VPU) + decoder conv (VPU MACs)
# ----------------------------------------------------------------------------
def _make_fused_kernel(T, H, W, C, CO_PAD, emit_coded):
    HW = H * W
    # We need tap[i] = img[i + sh] with sh = (ky-1)*W + (kx-1).
    # pltpu.roll follows jnp.roll semantics (out[i] = in[(i - shift) % n]),
    # so the roll amount is (-sh) % HW.  Out-of-image wraps are zeroed by the
    # host-precomputed per-tap boundary masks.
    roll_amt = [(-((ky - 1) * W + (kx - 1))) % HW for ky in range(3) for kx in range(3)]

    def kernel(x_ref, mask_ref, tmask_ref, tw_ref, tb_ref, dw_ref, db_ref, *out_refs):
        out_ref = out_refs[0]

        # ---- Stage 1: coded-exposure shutter (normalization folded into mask_norm) ----
        coded = jnp.sum(x_ref[0] * mask_ref[...], axis=0, keepdims=True)      # (1, HW) f32
        if emit_coded:
            out_refs[1][0] = coded                                             # only if requested

        # Broadcast once so every subsequent tap op is a full (C, HW) vreg op.
        codedb = jnp.broadcast_to(coded, (C, HW))
        tw = tw_ref[...]                                                       # (C, 9)
        dw = dw_ref[...]                                                       # (CO_PAD, 9*C)

        # ---- Stage 2: tree conv 1 -> C (3x3, pad 1) + ReLU; taps via pltpu.roll ----
        acc = jnp.zeros((C, HW), jnp.float32)
        for tap in range(9):
            amt = roll_amt[tap]
            if amt == 0:
                r = codedb                                   # centre tap: no shift, mask == 1
            else:
                r = pltpu.roll(codedb, amt, axis=1) * tmask_ref[tap:tap + 1, :]
            acc = acc + tw[:, tap:tap + 1] * r               # (C,1)*(C,HW) lane-broadcast MAC
        multi = jnp.maximum(acc + tb_ref[...], 0.0)          # (C, HW)

        # ---- Stage 3: decoder conv C -> CO as 72 VPU broadcast MACs (no im2col / MXU) ----
        out_acc = jnp.zeros((CO_PAD, HW), jnp.float32)
        for tap in range(9):
            amt = roll_amt[tap]
            if amt == 0:
                r = multi
            else:
                r = pltpu.roll(multi, amt, axis=1) * tmask_ref[tap:tap + 1, :]
            base = tap * C
            for c in range(C):
                out_acc = out_acc + dw[:, base + c:base + c + 1] * r[c:c + 1, :]
        out_ref[0] = out_acc + db_ref[...]                   # dense (CO_PAD, HW) store

    return kernel


def tree_rgbw_forward(x_flat, mask_norm, tap_mask, tree_w_cols, tree_b_col,
                      dec_w_mat, dec_b_pad, *, H, W, C, CO, CO_PAD, get_coded):
    B, T, HW = x_flat.shape
    kernel = _make_fused_kernel(T, H, W, C, CO_PAD, get_coded)

    out_shape = jax.ShapeDtypeStruct((B, CO_PAD, HW), jnp.float32)
    out_spec = pl.BlockSpec((1, CO_PAD, HW), lambda b: (b, 0, 0))
    if get_coded:
        out_shape = (out_shape, jax.ShapeDtypeStruct((B, 1, HW), jnp.float32))
        out_spec = (out_spec, pl.BlockSpec((1, 1, HW), lambda b: (b, 0, 0)))

    res = pl.pallas_call(
        kernel,
        out_shape=out_shape,
        grid=(B,),
        in_specs=[
            pl.BlockSpec((1, T, HW), lambda b: (b, 0, 0)),    # x, lane-dense (256 lanes)
            pl.BlockSpec((T, HW), lambda b: (0, 0)),          # normalized shutter mask
            pl.BlockSpec((9, HW), lambda b: (0, 0)),          # per-tap boundary masks
            pl.BlockSpec((C, 9), lambda b: (0, 0)),           # tree conv weights (C, taps)
            pl.BlockSpec((C, 1), lambda b: (0, 0)),           # tree bias
            pl.BlockSpec((CO_PAD, 9 * C), lambda b: (0, 0)),  # decoder weights [co, tap*C+c]
            pl.BlockSpec((CO_PAD, 1), lambda b: (0, 0)),      # decoder bias (zero-padded rows)
        ],
        out_specs=out_spec,
        compiler_params=pltpu.CompilerParams(
            dimension_semantics=("parallel",),
        ),
    )(x_flat, mask_norm, tap_mask, tree_w_cols, tree_b_col, dec_w_mat, dec_b_pad)

    if get_coded:
        out_full, coded = res
    else:
        out_full = res
    out = out_full[:, :CO, :].reshape(B, CO, H, W)            # drop zero-weight pad channels
    if get_coded:
        return out, coded.reshape(B, H, W)
    return out


# ----------------------------------------------------------------------------
# Model wrapper (synthetic deterministic parameterization of TreeRGBWModel)
# ----------------------------------------------------------------------------
class TreeRGBWModelPallas:
    def __init__(self, key, T=8, H=16, W=16, k=3, p=1, num_channels=8,
                 out_channels=3, get_coded=False):
        assert k == 3 and p == 1, "kernel written for k=3, p=1"
        self.T, self.H, self.W = T, H, W
        self.C, self.CO, self.CO_PAD = num_channels, out_channels, 8
        self.get_coded = get_coded
        C, CO, HW = self.C, self.CO, H * W

        k_mask, k_tw, k_tb, k_dw, k_db = jax.random.split(key, 5)

        # shutter: per-pixel exposure length in [1, T]  ->  mask[t,h,w] = t < length[h,w]
        lengths = jax.random.randint(k_mask, (H, W), 1, T + 1)
        t_idx = jnp.arange(T)[:, None, None]
        self.mask = (t_idx < lengths[None, :, :]).astype(jnp.float32)          # (T,H,W)
        self.length = jnp.sum(self.mask, axis=0)                               # (H,W)
        # normalization pre-folded into the mask (no per-pixel divide in-kernel)
        self.mask_norm = (self.mask /
                          jnp.maximum(self.length, 1.0)[None]).reshape(T, HW)

        # per-tap boundary masks for the roll-built 3x3 / pad-1 conv taps
        hh = jnp.arange(H)[:, None]
        ww = jnp.arange(W)[None, :]
        tmasks = []
        for ky in range(3):
            for kx in range(3):
                valid = ((hh + ky - 1 >= 0) & (hh + ky - 1 < H) &
                         (ww + kx - 1 >= 0) & (ww + kx - 1 < W))
                tmasks.append(valid.astype(jnp.float32).reshape(HW))
        self.tap_mask = jnp.stack(tmasks, axis=0)                              # (9, HW)

        # tree (HWIO 3,3,1,C) and decoder (HWIO 3,3,C,CO) weights
        self.tree_w = 0.1 * jax.random.normal(k_tw, (3, 3, 1, C), jnp.float32)
        self.tree_b = 0.01 * jax.random.normal(k_tb, (C,), jnp.float32)
        self.dec_w = 0.1 * jax.random.normal(k_dw, (3, 3, C, CO), jnp.float32)
        self.dec_b = 0.01 * jax.random.normal(k_db, (CO,), jnp.float32)

        # kernel-side layouts
        self.tree_w_cols = jnp.transpose(self.tree_w[:, :, 0, :], (2, 0, 1)).reshape(C, 9)
        self.tree_b_col = self.tree_b.reshape(C, 1)
        dwm = jnp.transpose(self.dec_w, (3, 0, 1, 2)).reshape(CO, 9 * C)       # [co, tap*C + c]
        self.dec_w_mat = jnp.zeros((self.CO_PAD, 9 * C), jnp.float32).at[:CO].set(dwm)
        self.dec_b_pad = jnp.zeros((self.CO_PAD, 1), jnp.float32).at[:CO, 0].set(self.dec_b)

    def __call__(self, x_bthw, train=True):   # train flag unused: mask is fixed at init
        B = x_bthw.shape[0]
        x_flat = x_bthw.reshape(B, self.T, self.H * self.W)                    # free reshape
        return tree_rgbw_forward(
            x_flat, self.mask_norm, self.tap_mask, self.tree_w_cols, self.tree_b_col,
            self.dec_w_mat, self.dec_b_pad,
            H=self.H, W=self.W, C=self.C, CO=self.CO, CO_PAD=self.CO_PAD,
            get_coded=self.get_coded)


# ----------------------------------------------------------------------------
# Pure-JAX reference (lax.conv_general_dilated) for validation
# ----------------------------------------------------------------------------
def reference_forward(model, x):
    coded = jnp.einsum('bthw,thw->bhw', x, model.mask) / jnp.maximum(model.length, 1.0)
    multi = jax.nn.relu(
        lax.conv_general_dilated(coded[:, None, :, :], model.tree_w, (1, 1),
                                 ((1, 1), (1, 1)),
                                 dimension_numbers=('NCHW', 'HWIO', 'NCHW'))
        + model.tree_b[None, :, None, None])
    out = lax.conv_general_dilated(multi, model.dec_w, (1, 1), ((1, 1), (1, 1)),
                                   dimension_numbers=('NCHW', 'HWIO', 'NCHW')) \
        + model.dec_b[None, :, None, None]
    return out, coded


if __name__ == "__main__":
    key = jax.random.PRNGKey(0)
    k_model, k_input = jax.random.split(key)

    B, T, H, W = 2, 8, 16, 16
    model = TreeRGBWModelPallas(k_model, T=T, H=H, W=W, k=3, p=1,
                                num_channels=8, out_channels=3)

    # input "video" stack that the shutter codes: (B, T, H, W)
    x = jax.random.uniform(k_input, (B, T, H, W), jnp.float32)

    out = jax.block_until_ready(model(x))
    assert out.shape == (B, 3, H, W), out.shape
    assert bool(jnp.all(jnp.isfinite(out)))

    ref_out, ref_coded = reference_forward(model, x)
    ref_out = jax.block_until_ready(ref_out)
    max_diff = float(jnp.max(jnp.abs(out - ref_out)))
    assert max_diff < 1e-4, f"mismatch vs lax reference: max |diff| = {max_diff}"

    # get_coded=True variant: the coded-image output (and its DMA) only exists on request.
    model.get_coded = True
    out2, coded = jax.block_until_ready(model(x))
    assert coded.shape == (B, H, W)
    coded_diff = float(jnp.max(jnp.abs(coded - ref_coded)))
    assert coded_diff < 1e-5, f"coded mismatch: max |diff| = {coded_diff}"
    assert float(jnp.max(jnp.abs(out2 - out))) < 1e-6

    print("KERNEL_OK")
</pallas_src>

<mosaic_0001>
module attributes {stable_mosaic.version = 11 : i64} {
  func.func @kernel(%arg0: i32, %arg1: memref<1x8x256xf32, #tpu.memory_space<vmem>>, %arg2: memref<8x256xf32, #tpu.memory_space<vmem>>, %arg3: memref<9x256xf32, #tpu.memory_space<vmem>>, %arg4: memref<8x9xf32, #tpu.memory_space<vmem>>, %arg5: memref<8x1xf32, #tpu.memory_space<vmem>>, %arg6: memref<8x72xf32, #tpu.memory_space<vmem>>, %arg7: memref<8x1xf32, #tpu.memory_space<vmem>>, %arg8: memref<1x8x256xf32, #tpu.memory_space<vmem>>) attributes {dimension_semantics = [#tpu.dimension_semantics<parallel>], iteration_bounds = array<i64: 2>, scalar_prefetch = 0 : i64, scratch_operands = 0 : i64, tpu.core_type = #tpu.core_type<tc>, window_params = [{transform_indices = @transform_0, window_bounds = array<i64: 1, 8, 256>}, {pipeline_mode = #tpu.pipeline_mode<synchronous>, transform_indices = @transform_1, window_bounds = array<i64: 8, 256>}, {pipeline_mode = #tpu.pipeline_mode<synchronous>, transform_indices = @transform_2, window_bounds = array<i64: 9, 256>}, {pipeline_mode = #tpu.pipeline_mode<synchronous>, transform_indices = @transform_3, window_bounds = array<i64: 8, 9>}, {pipeline_mode = #tpu.pipeline_mode<synchronous>, transform_indices = @transform_4, window_bounds = array<i64: 8, 1>}, {pipeline_mode = #tpu.pipeline_mode<synchronous>, transform_indices = @transform_5, window_bounds = array<i64: 8, 72>}, {pipeline_mode = #tpu.pipeline_mode<synchronous>, transform_indices = @transform_6, window_bounds = array<i64: 8, 1>}, {transform_indices = @transform_7, window_bounds = array<i64: 1, 8, 256>}]} {
    %c0 = arith.constant 0 : index
    %c0_0 = arith.constant 0 : index
    %c0_1 = arith.constant 0 : index
    %0 = vector.load %arg1[%c0, %c0_0, %c0_1] : memref<1x8x256xf32, #tpu.memory_space<vmem>>, vector<1x8x256xf32>
    %1 = vector.shape_cast %0 : vector<1x8x256xf32> to vector<8x256xf32>
    %c0_2 = arith.constant 0 : index
    %c0_3 = arith.constant 0 : index
    %2 = vector.load %arg2[%c0_2, %c0_3] : memref<8x256xf32, #tpu.memory_space<vmem>>, vector<8x256xf32>
    %3 = arith.mulf %1, %2 : vector<8x256xf32>
    %cst = arith.constant dense<0.000000e+00> : vector<256xf32>
    %4 = vector.multi_reduction <add>, %3, %cst [0] : vector<8x256xf32> to vector<256xf32>
    %5 = vector.shape_cast %4 : vector<256xf32> to vector<1x256xf32>
    %6 = vector.shape_cast %5 : vector<1x256xf32> to vector<1x256xf32>
    %7 = vector.broadcast %6 : vector<1x256xf32> to vector<8x256xf32>
    %c0_4 = arith.constant 0 : index
    %c0_5 = arith.constant 0 : index
    %8 = vector.load %arg4[%c0_4, %c0_5] : memref<8x9xf32, #tpu.memory_space<vmem>>, vector<8x9xf32>
    %c0_6 = arith.constant 0 : index
    %c0_7 = arith.constant 0 : index
    %9 = vector.load %arg6[%c0_6, %c0_7] : memref<8x72xf32, #tpu.memory_space<vmem>>, vector<8x72xf32>
    %cst_8 = arith.constant 0.000000e+00 : f32
    %10 = vector.broadcast %cst_8 : f32 to vector<8x256xf32>
    %c17_i32 = arith.constant 17 : i32
    %11 = tpu.dynamic_rotate %7 by %c17_i32 dim 1 : vector<8x256xf32>, i32 -> vector<8x256xf32>
    %c0_9 = arith.constant 0 : index
    %c0_10 = arith.constant 0 : index
    %12 = vector.load %arg3[%c0_9, %c0_10] : memref<9x256xf32, #tpu.memory_space<vmem>>, vector<1x256xf32>
    %13 = vector.broadcast %12 : vector<1x256xf32> to vector<8x256xf32>
    %14 = arith.mulf %11, %13 : vector<8x256xf32>
    %15 = vector.extract_strided_slice %8 {offsets = [0, 0], sizes = [8, 1], strides = [1, 1]} : vector<8x9xf32> to vector<8x1xf32>
    %16 = vector.broadcast %15 : vector<8x1xf32> to vector<8x256xf32>
    %17 = arith.mulf %16, %14 : vector<8x256xf32>
    %18 = arith.addf %10, %17 : vector<8x256xf32>
    %c16_i32 = arith.constant 16 : i32
    %19 = tpu.dynamic_rotate %7 by %c16_i32 dim 1 : vector<8x256xf32>, i32 -> vector<8x256xf32>
    %c1 = arith.constant 1 : index
    %c0_11 = arith.constant 0 : index
    %20 = vector.load %arg3[%c1, %c0_11] : memref<9x256xf32, #tpu.memory_space<vmem>>, vector<1x256xf32>
    %21 = vector.broadcast %20 : vector<1x256xf32> to vector<8x256xf32>
    %22 = arith.mulf %19, %21 : vector<8x256xf32>
    %23 = vector.extract_strided_slice %8 {offsets = [0, 1], sizes = [8, 1], strides = [1, 1]} : vector<8x9xf32> to vector<8x1xf32>
    %24 = vector.broadcast %23 : vector<8x1xf32> to vector<8x256xf32>
    %25 = arith.mulf %24, %22 : vector<8x256xf32>
    %26 = arith.addf %18, %25 : vector<8x256xf32>
    %c15_i32 = arith.constant 15 : i32
    %27 = tpu.dynamic_rotate %7 by %c15_i32 dim 1 : vector<8x256xf32>, i32 -> vector<8x256xf32>
    %c2 = arith.constant 2 : index
    %c0_12 = arith.constant 0 : index
    %28 = vector.load %arg3[%c2, %c0_12] : memref<9x256xf32, #tpu.memory_space<vmem>>, vector<1x256xf32>
    %29 = vector.broadcast %28 : vector<1x256xf32> to vector<8x256xf32>
    %30 = arith.mulf %27, %29 : vector<8x256xf32>
    %31 = vector.extract_strided_slice %8 {offsets = [0, 2], sizes = [8, 1], strides = [1, 1]} : vector<8x9xf32> to vector<8x1xf32>
    %32 = vector.broadcast %31 : vector<8x1xf32> to vector<8x256xf32>
    %33 = arith.mulf %32, %30 : vector<8x256xf32>
    %34 = arith.addf %26, %33 : vector<8x256xf32>
    %c1_i32 = arith.constant 1 : i32
    %35 = tpu.dynamic_rotate %7 by %c1_i32 dim 1 : vector<8x256xf32>, i32 -> vector<8x256xf32>
    %c3 = arith.constant 3 : index
    %c0_13 = arith.constant 0 : index
    %36 = vector.load %arg3[%c3, %c0_13] : memref<9x256xf32, #tpu.memory_space<vmem>>, vector<1x256xf32>
    %37 = vector.broadcast %36 : vector<1x256xf32> to vector<8x256xf32>
    %38 = arith.mulf %35, %37 : vector<8x256xf32>
    %39 = vector.extract_strided_slice %8 {offsets = [0, 3], sizes = [8, 1], strides = [1, 1]} : vector<8x9xf32> to vector<8x1xf32>
    %40 = vector.broadcast %39 : vector<8x1xf32> to vector<8x256xf32>
    %41 = arith.mulf %40, %38 : vector<8x256xf32>
    %42 = arith.addf %34, %41 : vector<8x256xf32>
    %43 = vector.extract_strided_slice %8 {offsets = [0, 4], sizes = [8, 1], strides = [1, 1]} : vector<8x9xf32> to vector<8x1xf32>
    %44 = vector.broadcast %43 : vector<8x1xf32> to vector<8x256xf32>
    %45 = arith.mulf %44, %7 : vector<8x256xf32>
    %46 = arith.addf %42, %45 : vector<8x256xf32>
    %c255_i32 = arith.constant 255 : i32
    %47 = tpu.dynamic_rotate %7 by %c255_i32 dim 1 : vector<8x256xf32>, i32 -> vector<8x256xf32>
    %c5 = arith.constant 5 : index
    %c0_14 = arith.constant 0 : index
    %48 = vector.load %arg3[%c5, %c0_14] : memref<9x256xf32, #tpu.memory_space<vmem>>, vector<1x256xf32>
    %49 = vector.broadcast %48 : vector<1x256xf32> to vector<8x256xf32>
    %50 = arith.mulf %47, %49 : vector<8x256xf32>
    %51 = vector.extract_strided_slice %8 {offsets = [0, 5], sizes = [8, 1], strides = [1, 1]} : vector<8x9xf32> to vector<8x1xf32>
    %52 = vector.broadcast %51 : vector<8x1xf32> to vector<8x256xf32>
    %53 = arith.mulf %52, %50 : vector<8x256xf32>
    %54 = arith.addf %46, %53 : vector<8x256xf32>
    %c241_i32 = arith.constant 241 : i32
    %55 = tpu.dynamic_rotate %7 by %c241_i32 dim 1 : vector<8x256xf32>, i32 -> vector<8x256xf32>
    %c6 = arith.constant 6 : index
    %c0_15 = arith.constant 0 : index
    %56 = vector.load %arg3[%c6, %c0_15] : memref<9x256xf32, #tpu.memory_space<vmem>>, vector<1x256xf32>
    %57 = vector.broadcast %56 : vector<1x256xf32> to vector<8x256xf32>
    %58 = arith.mulf %55, %57 : vector<8x256xf32>
    %59 = vector.extract_strided_slice %8 {offsets = [0, 6], sizes = [8, 1], strides = [1, 1]} : vector<8x9xf32> to vector<8x1xf32>
    %60 = vector.broadcast %59 : vector<8x1xf32> to vector<8x256xf32>
    %61 = arith.mulf %60, %58 : vector<8x256xf32>
    %62 = arith.addf %54, %61 : vector<8x256xf32>
    %c240_i32 = arith.constant 240 : i32
    %63 = tpu.dynamic_rotate %7 by %c240_i32 dim 1 : vector<8x256xf32>, i32 -> vector<8x256xf32>
    %c7 = arith.constant 7 : index
    %c0_16 = arith.constant 0 : index
    %64 = vector.load %arg3[%c7, %c0_16] : memref<9x256xf32, #tpu.memory_space<vmem>>, vector<1x256xf32>
    %65 = vector.broadcast %64 : vector<1x256xf32> to vector<8x256xf32>
    %66 = arith.mulf %63, %65 : vector<8x256xf32>
    %67 = vector.extract_strided_slice %8 {offsets = [0, 7], sizes = [8, 1], strides = [1, 1]} : vector<8x9xf32> to vector<8x1xf32>
    %68 = vector.broadcast %67 : vector<8x1xf32> to vector<8x256xf32>
    %69 = arith.mulf %68, %66 : vector<8x256xf32>
    %70 = arith.addf %62, %69 : vector<8x256xf32>
    %c239_i32 = arith.constant 239 : i32
    %71 = tpu.dynamic_rotate %7 by %c239_i32 dim 1 : vector<8x256xf32>, i32 -> vector<8x256xf32>
    %c8 = arith.constant 8 : index
    %c0_17 = arith.constant 0 : index
    %72 = vector.load %arg3[%c8, %c0_17] : memref<9x256xf32, #tpu.memory_space<vmem>>, vector<1x256xf32>
    %73 = vector.broadcast %72 : vector<1x256xf32> to vector<8x256xf32>
    %74 = arith.mulf %71, %73 : vector<8x256xf32>
    %75 = vector.extract_strided_slice %8 {offsets = [0, 8], sizes = [8, 1], strides = [1, 1]} : vector<8x9xf32> to vector<8x1xf32>
    %76 = vector.broadcast %75 : vector<8x1xf32> to vector<8x256xf32>
    %77 = arith.mulf %76, %74 : vector<8x256xf32>
    %78 = arith.addf %70, %77 : vector<8x256xf32>
    %c0_18 = arith.constant 0 : index
    %c0_19 = arith.constant 0 : index
    %79 = vector.load %arg5[%c0_18, %c0_19] : memref<8x1xf32, #tpu.memory_space<vmem>>, vector<8x1xf32>
    %80 = vector.broadcast %79 : vector<8x1xf32> to vector<8x256xf32>
    %81 = arith.addf %78, %80 : vector<8x256xf32>
    %cst_20 = arith.constant 0.000000e+00 : f32
    %82 = vector.broadcast %cst_20 : f32 to vector<8x256xf32>
    %83 = arith.maximumf %81, %82 : vector<8x256xf32>
    %cst_21 = arith.constant 0.000000e+00 : f32
    %84 = vector.broadcast %cst_21 : f32 to vector<8x256xf32>
    %c17_i32_22 = arith.constant 17 : i32
    %85 = tpu.dynamic_rotate %83 by %c17_i32_22 dim 1 : vector<8x256xf32>, i32 -> vector<8x256xf32>
    %c0_23 = arith.constant 0 : index
    %c0_24 = arith.constant 0 : index
    %86 = vector.load %arg3[%c0_23, %c0_24] : memref<9x256xf32, #tpu.memory_space<vmem>>, vector<1x256xf32>
    %87 = vector.broadcast %86 : vector<1x256xf32> to vector<8x256xf32>
    %88 = arith.mulf %85, %87 : vector<8x256xf32>
    %89 = vector.extract_strided_slice %9 {offsets = [0, 0], sizes = [8, 1], strides = [1, 1]} : vector<8x72xf32> to vector<8x1xf32>
    %90 = vector.extract_strided_slice %88 {offsets = [0, 0], sizes = [1, 256], strides = [1, 1]} : vector<8x256xf32> to vector<1x256xf32>
    %91 = vector.broadcast %89 : vector<8x1xf32> to vector<8x256xf32>
    %92 = vector.broadcast %90 : vector<1x256xf32> to vector<8x256xf32>
    %93 = arith.mulf %91, %92 : vector<8x256xf32>
    %94 = arith.addf %84, %93 : vector<8x256xf32>
    %95 = vector.extract_strided_slice %9 {offsets = [0, 1], sizes = [8, 1], strides = [1, 1]} : vector<8x72xf32> to vector<8x1xf32>
    %96 = vector.extract_strided_slice %88 {offsets = [1, 0], sizes = [1, 256], strides = [1, 1]} : vector<8x256xf32> to vector<1x256xf32>
    %97 = vector.broadcast %95 : vector<8x1xf32> to vector<8x256xf32>
    %98 = vector.broadcast %96 : vector<1x256xf32> to vector<8x256xf32>
    %99 = arith.mulf %97, %98 : vector<8x256xf32>
    %100 = arith.addf %94, %99 : vector<8x256xf32>
    %101 = vector.extract_strided_slice %9 {offsets = [0, 2], sizes = [8, 1], strides = [1, 1]} : vector<8x72xf32> to vector<8x1xf32>
    %102 = vector.extract_strided_slice %88 {offsets = [2, 0], sizes = [1, 256], strides = [1, 1]} : vector<8x256xf32> to vector<1x256xf32>
    %103 = vector.broadcast %101 : vector<8x1xf32> to vector<8x256xf32>
    %104 = vector.broadcast %102 : vector<1x256xf32> to vector<8x256xf32>
    %105 = arith.mulf %103, %104 : vector<8x256xf32>
    %106 = arith.addf %100, %105 : vector<8x256xf32>
    %107 = vector.extract_strided_slice %9 {offsets = [0, 3], sizes = [8, 1], strides = [1, 1]} : vector<8x72xf32> to vector<8x1xf32>
    %108 = vector.extract_strided_slice %88 {offsets = [3, 0], sizes = [1, 256], strides = [1, 1]} : vector<8x256xf32> to vector<1x256xf32>
    %109 = vector.broadcast %107 : vector<8x1xf32> to vector<8x256xf32>
    %110 = vector.broadcast %108 : vector<1x256xf32> to vector<8x256xf32>
    %111 = arith.mulf %109, %110 : vector<8x256xf32>
    %112 = arith.addf %106, %111 : vector<8x256xf32>
    %113 = vector.extract_strided_slice %9 {offsets = [0, 4], sizes = [8, 1], strides = [1, 1]} : vector<8x72xf32> to vector<8x1xf32>
    %114 = vector.extract_strided_slice %88 {offsets = [4, 0], sizes = [1, 256], strides = [1, 1]} : vector<8x256xf32> to vector<1x256xf32>
    %115 = vector.broadcast %113 : vector<8x1xf32> to vector<8x256xf32>
    %116 = vector.broadcast %114 : vector<1x256xf32> to vector<8x256xf32>
    %117 = arith.mulf %115, %116 : vector<8x256xf32>
    %118 = arith.addf %112, %117 : vector<8x256xf32>
    %119 = vector.extract_strided_slice %9 {offsets = [0, 5], sizes = [8, 1], strides = [1, 1]} : vector<8x72xf32> to vector<8x1xf32>
    %120 = vector.extract_strided_slice %88 {offsets = [5, 0], sizes = [1, 256], strides = [1, 1]} : vector<8x256xf32> to vector<1x256xf32>
    %121 = vector.broadcast %119 : vector<8x1xf32> to vector<8x256xf32>
    %122 = vector.broadcast %120 : vector<1x256xf32> to vector<8x256xf32>
    %123 = arith.mulf %121, %122 : vector<8x256xf32>
    %124 = arith.addf %118, %123 : vector<8x256xf32>
    %125 = vector.extract_strided_slice %9 {offsets = [0, 6], sizes = [8, 1], strides = [1, 1]} : vector<8x72xf32> to vector<8x1xf32>
    %126 = vector.extract_strided_slice %88 {offsets = [6, 0], sizes = [1, 256], strides = [1, 1]} : vector<8x256xf32> to vector<1x256xf32>
    %127 = vector.broadcast %125 : vector<8x1xf32> to vector<8x256xf32>
    %128 = vector.broadcast %126 : vector<1x256xf32> to vector<8x256xf32>
    %129 = arith.mulf %127, %128 : vector<8x256xf32>
    %130 = arith.addf %124, %129 : vector<8x256xf32>
    %131 = vector.extract_strided_slice %9 {offsets = [0, 7], sizes = [8, 1], strides = [1, 1]} : vector<8x72xf32> to vector<8x1xf32>
    %132 = vector.extract_strided_slice %88 {offsets = [7, 0], sizes = [1, 256], strides = [1, 1]} : vector<8x256xf32> to vector<1x256xf32>
    %133 = vector.broadcast %131 : vector<8x1xf32> to vector<8x256xf32>
    %134 = vector.broadcast %132 : vector<1x256xf32> to vector<8x256xf32>
    %135 = arith.mulf %133, %134 : vector<8x256xf32>
    %136 = arith.addf %130, %135 : vector<8x256xf32>
    %c16_i32_25 = arith.constant 16 : i32
    %137 = tpu.dynamic_rotate %83 by %c16_i32_25 dim 1 : vector<8x256xf32>, i32 -> vector<8x256xf32>
    %c1_26 = arith.constant 1 : index
    %c0_27 = arith.constant 0 : index
    %138 = vector.load %arg3[%c1_26, %c0_27] : memref<9x256xf32, #tpu.memory_space<vmem>>, vector<1x256xf32>
    %139 = vector.broadcast %138 : vector<1x256xf32> to vector<8x256xf32>
    %140 = arith.mulf %137, %139 : vector<8x256xf32>
    %141 = vector.extract_strided_slice %9 {offsets = [0, 8], sizes = [8, 1], strides = [1, 1]} : vector<8x72xf32> to vector<8x1xf32>
    %142 = vector.extract_strided_slice %140 {offsets = [0, 0], sizes = [1, 256], strides = [1, 1]} : vector<8x256xf32> to vector<1x256xf32>
    %143 = vector.broadcast %141 : vector<8x1xf32> to vector<8x256xf32>
    %144 = vector.broadcast %142 : vector<1x256xf32> to vector<8x256xf32>
    %145 = arith.mulf %143, %144 : vector<8x256xf32>
    %146 = arith.addf %136, %145 : vector<8x256xf32>
    %147 = vector.extract_strided_slice %9 {offsets = [0, 9], sizes = [8, 1], strides = [1, 1]} : vector<8x72xf32> to vector<8x1xf32>
    %148 = vector.extract_strided_slice %140 {offsets = [1, 0], sizes = [1, 256], strides = [1, 1]} : vector<8x256xf32> to vector<1x256xf32>
    %149 = vector.broadcast %147 : vector<8x1xf32> to vector<8x256xf32>
    %150 = vector.broadcast %148 : vector<1x256xf32> to vector<8x256xf32>
    %151 = arith.mulf %149, %150 : vector<8x256xf32>
    %152 = arith.addf %146, %151 : vector<8x256xf32>
    %153 = vector.extract_strided_slice %9 {offsets = [0, 10], sizes = [8, 1], strides = [1, 1]} : vector<8x72xf32> to vector<8x1xf32>
    %154 = vector.extract_strided_slice %140 {offsets = [2, 0], sizes = [1, 256], strides = [1, 1]} : vector<8x256xf32> to vector<1x256xf32>
    %155 = vector.broadcast %153 : vector<8x1xf32> to vector<8x256xf32>
    %156 = vector.broadcast %154 : vector<1x256xf32> to vector<8x256xf32>
    %157 = arith.mulf %155, %156 : vector<8x256xf32>
    %158 = arith.addf %152, %157 : vector<8x256xf32>
    %159 = vector.extract_strided_slice %9 {offsets = [0, 11], sizes = [8, 1], strides = [1, 1]} : vector<8x72xf32> to vector<8x1xf32>
    %160 = vector.extract_strided_slice %140 {offsets = [3, 0], sizes = [1, 256], strides = [1, 1]} : vector<8x256xf32> to vector<1x256xf32>
    %161 = vector.broadcast %159 : vector<8x1xf32> to vector<8x256xf32>
    %162 = vector.broadcast %160 : vector<1x256xf32> to vector<8x256xf32>
    %163 = arith.mulf %161, %162 : vector<8x256xf32>
    %164 = arith.addf %158, %163 : vector<8x256xf32>
    %165 = vector.extract_strided_slice %9 {offsets = [0, 12], sizes = [8, 1], strides = [1, 1]} : vector<8x72xf32> to vector<8x1xf32>
    %166 = vector.extract_strided_slice %140 {offsets = [4, 0], sizes = [1, 256], strides = [1, 1]} : vector<8x256xf32> to vector<1x256xf32>
    %167 = vector.broadcast %165 : vector<8x1xf32> to vector<8x256xf32>
    %168 = vector.broadcast %166 : vector<1x256xf32> to vector<8x256xf32>
    %169 = arith.mulf %167, %168 : vector<8x256xf32>
    %170 = arith.addf %164, %169 : vector<8x256xf32>
    %171 = vector.extract_strided_slice %9 {offsets = [0, 13], sizes = [8, 1], strides = [1, 1]} : vector<8x72xf32> to vector<8x1xf32>
    %172 = vector.extract_strided_slice %140 {offsets = [5, 0], sizes = [1, 256], strides = [1, 1]} : vector<8x256xf32> to vector<1x256xf32>
    %173 = vector.broadcast %171 : vector<8x1xf32> to vector<8x256xf32>
    %174 = vector.broadcast %172 : vector<1x256xf32> to vector<8x256xf32>
    %175 = arith.mulf %173, %174 : vector<8x256xf32>
    %176 = arith.addf %170, %175 : vector<8x256xf32>
    %177 = vector.extract_strided_slice %9 {offsets = [0, 14], sizes = [8, 1], strides = [1, 1]} : vector<8x72xf32> to vector<8x1xf32>
    %178 = vector.extract_strided_slice %140 {offsets = [6, 0], sizes = [1, 256], strides = [1, 1]} : vector<8x256xf32> to vector<1x256xf32>
    %179 = vector.broadcast %177 : vector<8x1xf32> to vector<8x256xf32>
    %180 = vector.broadcast %178 : vector<1x256xf32> to vector<8x256xf32>
    %181 = arith.mulf %179, %180 : vector<8x256xf32>
    %182 = arith.addf %176, %181 : vector<8x256xf32>
    %183 = vector.extract_strided_slice %9 {offsets = [0, 15], sizes = [8, 1], strides = [1, 1]} : vector<8x72xf32> to vector<8x1xf32>
    %184 = vector.extract_strided_slice %140 {offsets = [7, 0], sizes = [1, 256], strides = [1, 1]} : vector<8x256xf32> to vector<1x256xf32>
    %185 = vector.broadcast %183 : vector<8x1xf32> to vector<8x256xf32>
    %186 = vector.broadcast %184 : vector<1x256xf32> to vector<8x256xf32>
    %187 = arith.mulf %185, %186 : vector<8x256xf32>
    %188 = arith.addf %182, %187 : vector<8x256xf32>
    %c15_i32_28 = arith.constant 15 : i32
    %189 = tpu.dynamic_rotate %83 by %c15_i32_28 dim 1 : vector<8x256xf32>, i32 -> vector<8x256xf32>
    %c2_29 = arith.constant 2 : index
    %c0_30 = arith.constant 0 : index
    %190 = vector.load %arg3[%c2_29, %c0_30] : memref<9x256xf32, #tpu.memory_space<vmem>>, vector<1x256xf32>
    %191 = vector.broadcast %190 : vector<1x256xf32> to vector<8x256xf32>
    %192 = arith.mulf %189, %191 : vector<8x256xf32>
    %193 = vector.extract_strided_slice %9 {offsets = [0, 16], sizes = [8, 1], strides = [1, 1]} : vector<8x72xf32> to vector<8x1xf32>
    %194 = vector.extract_strided_slice %192 {offsets = [0, 0], sizes = [1, 256], strides = [1, 1]} : vector<8x256xf32> to vector<1x256xf32>
    %195 = vector.broadcast %193 : vector<8x1xf32> to vector<8x256xf32>
    %196 = vector.broadcast %194 : vector<1x256xf32> to vector<8x256xf32>
    %197 = arith.mulf %195, %196 : vector<8x256xf32>
    %198 = arith.addf %188, %197 : vector<8x256xf32>
    %199 = vector.extract_strided_slice %9 {offsets = [0, 17], sizes = [8, 1], strides = [1, 1]} : vector<8x72xf32> to vector<8x1xf32>
    %200 = vector.extract_strided_slice %192 {offsets = [1, 0], sizes = [1, 256], strides = [1, 1]} : vector<8x256xf32> to vector<1x256xf32>
    %201 = vector.broadcast %199 : vector<8x1xf32> to vector<8x256xf32>
    %202 = vector.broadcast %200 : vector<1x256xf32> to vector<8x256xf32>
    %203 = arith.mulf %201, %202 : vector<8x256xf32>
    %204 = arith.addf %198, %203 : vector<8x256xf32>
    %205 = vector.extract_strided_slice %9 {offsets = [0, 18], sizes = [8, 1], strides = [1, 1]} : vector<8x72xf32> to vector<8x1xf32>
    %206 = vector.extract_strided_slice %192 {offsets = [2, 0], sizes = [1, 256], strides = [1, 1]} : vector<8x256xf32> to vector<1x256xf32>
    %207 = vector.broadcast %205 : vector<8x1xf32> to vector<8x256xf32>
    %208 = vector.broadcast %206 : vector<1x256xf32> to vector<8x256xf32>
    %209 = arith.mulf %207, %208 : vector<8x256xf32>
    %210 = arith.addf %204, %209 : vector<8x256xf32>
    %211 = vector.extract_strided_slice %9 {offsets = [0, 19], sizes = [8, 1], strides = [1, 1]} : vector<8x72xf32> to vector<8x1xf32>
    %212 = vector.extract_strided_slice %192 {offsets = [3, 0], sizes = [1, 256], strides = [1, 1]} : vector<8x256xf32> to vector<1x256xf32>
    %213 = vector.broadcast %211 : vector<8x1xf32> to vector<8x256xf32>
    %214 = vector.broadcast %212 : vector<1x256xf32> to vector<8x256xf32>
    %215 = arith.mulf %213, %214 : vector<8x256xf32>
    %216 = arith.addf %210, %215 : vector<8x256xf32>
    %217 = vector.extract_strided_slice %9 {offsets = [0, 20], sizes = [8, 1], strides = [1, 1]} : vector<8x72xf32> to vector<8x1xf32>
    %218 = vector.extract_strided_slice %192 {offsets = [4, 0], sizes = [1, 256], strides = [1, 1]} : vector<8x256xf32> to vector<1x256xf32>
    %219 = vector.broadcast %217 : vector<8x1xf32> to vector<8x256xf32>
    %220 = vector.broadcast %218 : vector<1x256xf32> to vector<8x256xf32>
    %221 = arith.mulf %219, %220 : vector<8x256xf32>
    %222 = arith.addf %216, %221 : vector<8x256xf32>
    %223 = vector.extract_strided_slice %9 {offsets = [0, 21], sizes = [8, 1], strides = [1, 1]} : vector<8x72xf32> to vector<8x1xf32>
    %224 = vector.extract_strided_slice %192 {offsets = [5, 0], sizes = [1, 256], strides = [1, 1]} : vector<8x256xf32> to vector<1x256xf32>
    %225 = vector.broadcast %223 : vector<8x1xf32> to vector<8x256xf32>
    %226 = vector.broadcast %224 : vector<1x256xf32> to vector<8x256xf32>
    %227 = arith.mulf %225, %226 : vector<8x256xf32>
    %228 = arith.addf %222, %227 : vector<8x256xf32>
    %229 = vector.extract_strided_slice %9 {offsets = [0, 22], sizes = [8, 1], strides = [1, 1]} : vector<8x72xf32> to vector<8x1xf32>
    %230 = vector.extract_strided_slice %192 {offsets = [6, 0], sizes = [1, 256], strides = [1, 1]} : vector<8x256xf32> to vector<1x256xf32>
    %231 = vector.broadcast %229 : vector<8x1xf32> to vector<8x256xf32>
    %232 = vector.broadcast %230 : vector<1x256xf32> to vector<8x256xf32>
    %233 = arith.mulf %231, %232 : vector<8x256xf32>
    %234 = arith.addf %228, %233 : vector<8x256xf32>
    %235 = vector.extract_strided_slice %9 {offsets = [0, 23], sizes = [8, 1], strides = [1, 1]} : vector<8x72xf32> to vector<8x1xf32>
    %236 = vector.extract_strided_slice %192 {offsets = [7, 0], sizes = [1, 256], strides = [1, 1]} : vector<8x256xf32> to vector<1x256xf32>
    %237 = vector.broadcast %235 : vector<8x1xf32> to vector<8x256xf32>
    %238 = vector.broadcast %236 : vector<1x256xf32> to vector<8x256xf32>
    %239 = arith.mulf %237, %238 : vector<8x256xf32>
    %240 = arith.addf %234, %239 : vector<8x256xf32>
    %c1_i32_31 = arith.constant 1 : i32
    %241 = tpu.dynamic_rotate %83 by %c1_i32_31 dim 1 : vector<8x256xf32>, i32 -> vector<8x256xf32>
    %c3_32 = arith.constant 3 : index
    %c0_33 = arith.constant 0 : index
    %242 = vector.load %arg3[%c3_32, %c0_33] : memref<9x256xf32, #tpu.memory_space<vmem>>, vector<1x256xf32>
    %243 = vector.broadcast %242 : vector<1x256xf32> to vector<8x256xf32>
    %244 = arith.mulf %241, %243 : vector<8x256xf32>
    %245 = vector.extract_strided_slice %9 {offsets = [0, 24], sizes = [8, 1], strides = [1, 1]} : vector<8x72xf32> to vector<8x1xf32>
    %246 = vector.extract_strided_slice %244 {offsets = [0, 0], sizes = [1, 256], strides = [1, 1]} : vector<8x256xf32> to vector<1x256xf32>
    %247 = vector.broadcast %245 : vector<8x1xf32> to vector<8x256xf32>
    %248 = vector.broadcast %246 : vector<1x256xf32> to vector<8x256xf32>
    %249 = arith.mulf %247, %248 : vector<8x256xf32>
    %250 = arith.addf %240, %249 : vector<8x256xf32>
    %251 = vector.extract_strided_slice %9 {offsets = [0, 25], sizes = [8, 1], strides = [1, 1]} : vector<8x72xf32> to vector<8x1xf32>
    %252 = vector.extract_strided_slice %244 {offsets = [1, 0], sizes = [1, 256], strides = [1, 1]} : vector<8x256xf32> to vector<1x256xf32>
    %253 = vector.broadcast %251 : vector<8x1xf32> to vector<8x256xf32>
    %254 = vector.broadcast %252 : vector<1x256xf32> to vector<8x256xf32>
    %255 = arith.mulf %253, %254 : vector<8x256xf32>
    %256 = arith.addf %250, %255 : vector<8x256xf32>
    %257 = vector.extract_strided_slice %9 {offsets = [0, 26], sizes = [8, 1], strides = [1, 1]} : vector<8x72xf32> to vector<8x1xf32>
    %258 = vector.extract_strided_slice %244 {offsets = [2, 0], sizes = [1, 256], strides = [1, 1]} : vector<8x256xf32> to vector<1x256xf32>
    %259 = vector.broadcast %257 : vector<8x1xf32> to vector<8x256xf32>
    %260 = vector.broadcast %258 : vector<1x256xf32> to vector<8x256xf32>
    %261 = arith.mulf %259, %260 : vector<8x256xf32>
    %262 = arith.addf %256, %261 : vector<8x256xf32>
    %263 = vector.extract_strided_slice %9 {offsets = [0, 27], sizes = [8, 1], strides = [1, 1]} : vector<8x72xf32> to vector<8x1xf32>
    %264 = vector.extract_strided_slice %244 {offsets = [3, 0], sizes = [1, 256], strides = [1, 1]} : vector<8x256xf32> to vector<1x256xf32>
    %265 = vector.broadcast %263 : vector<8x1xf32> to vector<8x256xf32>
    %266 = vector.broadcast %264 : vector<1x256xf32> to vector<8x256xf32>
    %267 = arith.mulf %265, %266 : vector<8x256xf32>
    %268 = arith.addf %262, %267 : vector<8x256xf32>
    %269 = vector.extract_strided_slice %9 {offsets = [0, 28], sizes = [8, 1], strides = [1, 1]} : vector<8x72xf32> to vector<8x1xf32>
    %270 = vector.extract_strided_slice %244 {offsets = [4, 0], sizes = [1, 256], strides = [1, 1]} : vector<8x256xf32> to vector<1x256xf32>
    %271 = vector.broadcast %269 : vector<8x1xf32> to vector<8x256xf32>
    %272 = vector.broadcast %270 : vector<1x256xf32> to vector<8x256xf32>
    %273 = arith.mulf %271, %272 : vector<8x256xf32>
    %274 = arith.addf %268, %273 : vector<8x256xf32>
    %275 = vector.extract_strided_slice %9 {offsets = [0, 29], sizes = [8, 1], strides = [1, 1]} : vector<8x72xf32> to vector<8x1xf32>
    %276 = vector.extract_strided_slice %244 {offsets = [5, 0], sizes = [1, 256], strides = [1, 1]} : vector<8x256xf32> to vector<1x256xf32>
    %277 = vector.broadcast %275 : vector<8x1xf32> to vector<8x256xf32>
    %278 = vector.broadcast %276 : vector<1x256xf32> to vector<8x256xf32>
    %279 = arith.mulf %277, %278 : vector<8x256xf32>
    %280 = arith.addf %274, %279 : vector<8x256xf32>
    %281 = vector.extract_strided_slice %9 {offsets = [0, 30], sizes = [8, 1], strides = [1, 1]} : vector<8x72xf32> to vector<8x1xf32>
    %282 = vector.extract_strided_slice %244 {offsets = [6, 0], sizes = [1, 256], strides = [1, 1]} : vector<8x256xf32> to vector<1x256xf32>
    %283 = vector.broadcast %281 : vector<8x1xf32> to vector<8x256xf32>
    %284 = vector.broadcast %282 : vector<1x256xf32> to vector<8x256xf32>
    %285 = arith.mulf %283, %284 : vector<8x256xf32>
    %286 = arith.addf %280, %285 : vector<8x256xf32>
    %287 = vector.extract_strided_slice %9 {offsets = [0, 31], sizes = [8, 1], strides = [1, 1]} : vector<8x72xf32> to vector<8x1xf32>
    %288 = vector.extract_strided_slice %244 {offsets = [7, 0], sizes = [1, 256], strides = [1, 1]} : vector<8x256xf32> to vector<1x256xf32>
    %289 = vector.broadcast %287 : vector<8x1xf32> to vector<8x256xf32>
    %290 = vector.broadcast %288 : vector<1x256xf32> to vector<8x256xf32>
    %291 = arith.mulf %289, %290 : vector<8x256xf32>
    %292 = arith.addf %286, %291 : vector<8x256xf32>
    %293 = vector.extract_strided_slice %9 {offsets = [0, 32], sizes = [8, 1], strides = [1, 1]} : vector<8x72xf32> to vector<8x1xf32>
    %294 = vector.extract_strided_slice %83 {offsets = [0, 0], sizes = [1, 256], strides = [1, 1]} : vector<8x256xf32> to vector<1x256xf32>
    %295 = vector.broadcast %293 : vector<8x1xf32> to vector<8x256xf32>
    %296 = vector.broadcast %294 : vector<1x256xf32> to vector<8x256xf32>
    %297 = arith.mulf %295, %296 : vector<8x256xf32>
    %298 = arith.addf %292, %297 : vector<8x256xf32>
    %299 = vector.extract_strided_slice %9 {offsets = [0, 33], sizes = [8, 1], strides = [1, 1]} : vector<8x72xf32> to vector<8x1xf32>
    %300 = vector.extract_strided_slice %83 {offsets = [1, 0], sizes = [1, 256], strides = [1, 1]} : vector<8x256xf32> to vector<1x256xf32>
    %301 = vector.broadcast %299 : vector<8x1xf32> to vector<8x256xf32>
    %302 = vector.broadcast %300 : vector<1x256xf32> to vector<8x256xf32>
    %303 = arith.mulf %301, %302 : vector<8x256xf32>
    %304 = arith.addf %298, %303 : vector<8x256xf32>
    %305 = vector.extract_strided_slice %9 {offsets = [0, 34], sizes = [8, 1], strides = [1, 1]} : vector<8x72xf32> to vector<8x1xf32>
    %306 = vector.extract_strided_slice %83 {offsets = [2, 0], sizes = [1, 256], strides = [1, 1]} : vector<8x256xf32> to vector<1x256xf32>
    %307 = vector.broadcast %305 : vector<8x1xf32> to vector<8x256xf32>
    %308 = vector.broadcast %306 : vector<1x256xf32> to vector<8x256xf32>
    %309 = arith.mulf %307, %308 : vector<8x256xf32>
    %310 = arith.addf %304, %309 : vector<8x256xf32>
    %311 = vector.extract_strided_slice %9 {offsets = [0, 35], sizes = [8, 1], strides = [1, 1]} : vector<8x72xf32> to vector<8x1xf32>
    %312 = vector.extract_strided_slice %83 {offsets = [3, 0], sizes = [1, 256], strides = [1, 1]} : vector<8x256xf32> to vector<1x256xf32>
    %313 = vector.broadcast %311 : vector<8x1xf32> to vector<8x256xf32>
    %314 = vector.broadcast %312 : vector<1x256xf32> to vector<8x256xf32>
    %315 = arith.mulf %313, %314 : vector<8x256xf32>
    %316 = arith.addf %310, %315 : vector<8x256xf32>
    %317 = vector.extract_strided_slice %9 {offsets = [0, 36], sizes = [8, 1], strides = [1, 1]} : vector<8x72xf32> to vector<8x1xf32>
    %318 = vector.extract_strided_slice %83 {offsets = [4, 0], sizes = [1, 256], strides = [1, 1]} : vector<8x256xf32> to vector<1x256xf32>
    %319 = vector.broadcast %317 : vector<8x1xf32> to vector<8x256xf32>
    %320 = vector.broadcast %318 : vector<1x256xf32> to vector<8x256xf32>
    %321 = arith.mulf %319, %320 : vector<8x256xf32>
    %322 = arith.addf %316, %321 : vector<8x256xf32>
    %323 = vector.extract_strided_slice %9 {offsets = [0, 37], sizes = [8, 1], strides = [1, 1]} : vector<8x72xf32> to vector<8x1xf32>
    %324 = vector.extract_strided_slice %83 {offsets = [5, 0], sizes = [1, 256], strides = [1, 1]} : vector<8x256xf32> to vector<1x256xf32>
    %325 = vector.broadcast %323 : vector<8x1xf32> to vector<8x256xf32>
    %326 = vector.broadcast %324 : vector<1x256xf32> to vector<8x256xf32>
    %327 = arith.mulf %325, %326 : vector<8x256xf32>
    %328 = arith.addf %322, %327 : vector<8x256xf32>
    %329 = vector.extract_strided_slice %9 {offsets = [0, 38], sizes = [8, 1], strides = [1, 1]} : vector<8x72xf32> to vector<8x1xf32>
    %330 = vector.extract_strided_slice %83 {offsets = [6, 0], sizes = [1, 256], strides = [1, 1]} : vector<8x256xf32> to vector<1x256xf32>
    %331 = vector.broadcast %329 : vector<8x1xf32> to vector<8x256xf32>
    %332 = vector.broadcast %330 : vector<1x256xf32> to vector<8x256xf32>
    %333 = arith.mulf %331, %332 : vector<8x256xf32>
    %334 = arith.addf %328, %333 : vector<8x256xf32>
    %335 = vector.extract_strided_slice %9 {offsets = [0, 39], sizes = [8, 1], strides = [1, 1]} : vector<8x72xf32> to vector<8x1xf32>
    %336 = vector.extract_strided_slice %83 {offsets = [7, 0], sizes = [1, 256], strides = [1, 1]} : vector<8x256xf32> to vector<1x256xf32>
    %337 = vector.broadcast %335 : vector<8x1xf32> to vector<8x256xf32>
    %338 = vector.broadcast %336 : vector<1x256xf32> to vector<8x256xf32>
    %339 = arith.mulf %337, %338 : vector<8x256xf32>
    %340 = arith.addf %334, %339 : vector<8x256xf32>
    %c255_i32_34 = arith.constant 255 : i32
    %341 = tpu.dynamic_rotate %83 by %c255_i32_34 dim 1 : vector<8x256xf32>, i32 -> vector<8x256xf32>
    %c5_35 = arith.constant 5 : index
    %c0_36 = arith.constant 0 : index
    %342 = vector.load %arg3[%c5_35, %c0_36] : memref<9x256xf32, #tpu.memory_space<vmem>>, vector<1x256xf32>
    %343 = vector.broadcast %342 : vector<1x256xf32> to vector<8x256xf32>
    %344 = arith.mulf %341, %343 : vector<8x256xf32>
    %345 = vector.extract_strided_slice %9 {offsets = [0, 40], sizes = [8, 1], strides = [1, 1]} : vector<8x72xf32> to vector<8x1xf32>
    %346 = vector.extract_strided_slice %344 {offsets = [0, 0], sizes = [1, 256], strides = [1, 1]} : vector<8x256xf32> to vector<1x256xf32>
    %347 = vector.broadcast %345 : vector<8x1xf32> to vector<8x256xf32>
    %348 = vector.broadcast %346 : vector<1x256xf32> to vector<8x256xf32>
    %349 = arith.mulf %347, %348 : vector<8x256xf32>
    %350 = arith.addf %340, %349 : vector<8x256xf32>
    %351 = vector.extract_strided_slice %9 {offsets = [0, 41], sizes = [8, 1], strides = [1, 1]} : vector<8x72xf32> to vector<8x1xf32>
    %352 = vector.extract_strided_slice %344 {offsets = [1, 0], sizes = [1, 256], strides = [1, 1]} : vector<8x256xf32> to vector<1x256xf32>
    %353 = vector.broadcast %351 : vector<8x1xf32> to vector<8x256xf32>
    %354 = vector.broadcast %352 : vector<1x256xf32> to vector<8x256xf32>
    %355 = arith.mulf %353, %354 : vector<8x256xf32>
    %356 = arith.addf %350, %355 : vector<8x256xf32>
    %357 = vector.extract_strided_slice %9 {offsets = [0, 42], sizes = [8, 1], strides = [1, 1]} : vector<8x72xf32> to vector<8x1xf32>
    %358 = vector.extract_strided_slice %344 {offsets = [2, 0], sizes = [1, 256], strides = [1, 1]} : vector<8x256xf32> to vector<1x256xf32>
    %359 = vector.broadcast %357 : vector<8x1xf32> to vector<8x256xf32>
    %360 = vector.broadcast %358 : vector<1x256xf32> to vector<8x256xf32>
    %361 = arith.mulf %359, %360 : vector<8x256xf32>
    %362 = arith.addf %356, %361 : vector<8x256xf32>
    %363 = vector.extract_strided_slice %9 {offsets = [0, 43], sizes = [8, 1], strides = [1, 1]} : vector<8x72xf32> to vector<8x1xf32>
    %364 = vector.extract_strided_slice %344 {offsets = [3, 0], sizes = [1, 256], strides = [1, 1]} : vector<8x256xf32> to vector<1x256xf32>
    %365 = vector.broadcast %363 : vector<8x1xf32> to vector<8x256xf32>
    %366 = vector.broadcast %364 : vector<1x256xf32> to vector<8x256xf32>
    %367 = arith.mulf %365, %366 : vector<8x256xf32>
    %368 = arith.addf %362, %367 : vector<8x256xf32>
    %369 = vector.extract_strided_slice %9 {offsets = [0, 44], sizes = [8, 1], strides = [1, 1]} : vector<8x72xf32> to vector<8x1xf32>
    %370 = vector.extract_strided_slice %344 {offsets = [4, 0], sizes = [1, 256], strides = [1, 1]} : vector<8x256xf32> to vector<1x256xf32>
    %371 = vector.broadcast %369 : vector<8x1xf32> to vector<8x256xf32>
    %372 = vector.broadcast %370 : vector<1x256xf32> to vector<8x256xf32>
    %373 = arith.mulf %371, %372 : vector<8x256xf32>
    %374 = arith.addf %368, %373 : vector<8x256xf32>
    %375 = vector.extract_strided_slice %9 {offsets = [0, 45], sizes = [8, 1], strides = [1, 1]} : vector<8x72xf32> to vector<8x1xf32>
    %376 = vector.extract_strided_slice %344 {offsets = [5, 0], sizes = [1, 256], strides = [1, 1]} : vector<8x256xf32> to vector<1x256xf32>
    %377 = vector.broadcast %375 : vector<8x1xf32> to vector<8x256xf32>
    %378 = vector.broadcast %376 : vector<1x256xf32> to vector<8x256xf32>
    %379 = arith.mulf %377, %378 : vector<8x256xf32>
    %380 = arith.addf %374, %379 : vector<8x256xf32>
    %381 = vector.extract_strided_slice %9 {offsets = [0, 46], sizes = [8, 1], strides = [1, 1]} : vector<8x72xf32> to vector<8x1xf32>
    %382 = vector.extract_strided_slice %344 {offsets = [6, 0], sizes = [1, 256], strides = [1, 1]} : vector<8x256xf32> to vector<1x256xf32>
    %383 = vector.broadcast %381 : vector<8x1xf32> to vector<8x256xf32>
    %384 = vector.broadcast %382 : vector<1x256xf32> to vector<8x256xf32>
    %385 = arith.mulf %383, %384 : vector<8x256xf32>
    %386 = arith.addf %380, %385 : vector<8x256xf32>
    %387 = vector.extract_strided_slice %9 {offsets = [0, 47], sizes = [8, 1], strides = [1, 1]} : vector<8x72xf32> to vector<8x1xf32>
    %388 = vector.extract_strided_slice %344 {offsets = [7, 0], sizes = [1, 256], strides = [1, 1]} : vector<8x256xf32> to vector<1x256xf32>
    %389 = vector.broadcast %387 : vector<8x1xf32> to vector<8x256xf32>
    %390 = vector.broadcast %388 : vector<1x256xf32> to vector<8x256xf32>
    %391 = arith.mulf %389, %390 : vector<8x256xf32>
    %392 = arith.addf %386, %391 : vector<8x256xf32>
    %c241_i32_37 = arith.constant 241 : i32
    %393 = tpu.dynamic_rotate %83 by %c241_i32_37 dim 1 : vector<8x256xf32>, i32 -> vector<8x256xf32>
    %c6_38 = arith.constant 6 : index
    %c0_39 = arith.constant 0 : index
    %394 = vector.load %arg3[%c6_38, %c0_39] : memref<9x256xf32, #tpu.memory_space<vmem>>, vector<1x256xf32>
    %395 = vector.broadcast %394 : vector<1x256xf32> to vector<8x256xf32>
    %396 = arith.mulf %393, %395 : vector<8x256xf32>
    %397 = vector.extract_strided_slice %9 {offsets = [0, 48], sizes = [8, 1], strides = [1, 1]} : vector<8x72xf32> to vector<8x1xf32>
    %398 = vector.extract_strided_slice %396 {offsets = [0, 0], sizes = [1, 256], strides = [1, 1]} : vector<8x256xf32> to vector<1x256xf32>
    %399 = vector.broadcast %397 : vector<8x1xf32> to vector<8x256xf32>
    %400 = vector.broadcast %398 : vector<1x256xf32> to vector<8x256xf32>
    %401 = arith.mulf %399, %400 : vector<8x256xf32>
    %402 = arith.addf %392, %401 : vector<8x256xf32>
    %403 = vector.extract_strided_slice %9 {offsets = [0, 49], sizes = [8, 1], strides = [1, 1]} : vector<8x72xf32> to vector<8x1xf32>
    %404 = vector.extract_strided_slice %396 {offsets = [1, 0], sizes = [1, 256], strides = [1, 1]} : vector<8x256xf32> to vector<1x256xf32>
    %405 = vector.broadcast %403 : vector<8x1xf32> to vector<8x256xf32>
    %406 = vector.broadcast %404 : vector<1x256xf32> to vector<8x256xf32>
    %407 = arith.mulf %405, %406 : vector<8x256xf32>
    %408 = arith.addf %402, %407 : vector<8x256xf32>
    %409 = vector.extract_strided_slice %9 {offsets = [0, 50], sizes = [8, 1], strides = [1, 1]} : vector<8x72xf32> to vector<8x1xf32>
    %410 = vector.extract_strided_slice %396 {offsets = [2, 0], sizes = [1, 256], strides = [1, 1]} : vector<8x256xf32> to vector<1x256xf32>
    %411 = vector.broadcast %409 : vector<8x1xf32> to vector<8x256xf32>
    %412 = vector.broadcast %410 : vector<1x256xf32> to vector<8x256xf32>
    %413 = arith.mulf %411, %412 : vector<8x256xf32>
    %414 = arith.addf %408, %413 : vector<8x256xf32>
    %415 = vector.extract_strided_slice %9 {offsets = [0, 51], sizes = [8, 1], strides = [1, 1]} : vector<8x72xf32> to vector<8x1xf32>
    %416 = vector.extract_strided_slice %396 {offsets = [3, 0], sizes = [1, 256], strides = [1, 1]} : vector<8x256xf32> to vector<1x256xf32>
    %417 = vector.broadcast %415 : vector<8x1xf32> to vector<8x256xf32>
    %418 = vector.broadcast %416 : vector<1x256xf32> to vector<8x256xf32>
    %419 = arith.mulf %417, %418 : vector<8x256xf32>
    %420 = arith.addf %414, %419 : vector<8x256xf32>
    %421 = vector.extract_strided_slice %9 {offsets = [0, 52], sizes = [8, 1], strides = [1, 1]} : vector<8x72xf32> to vector<8x1xf32>
    %422 = vector.extract_strided_slice %396 {offsets = [4, 0], sizes = [1, 256], strides = [1, 1]} : vector<8x256xf32> to vector<1x256xf32>
    %423 = vector.broadcast %421 : vector<8x1xf32> to vector<8x256xf32>
    %424 = vector.broadcast %422 : vector<1x256xf32> to vector<8x256xf32>
    %425 = arith.mulf %423, %424 : vector<8x256xf32>
    %426 = arith.addf %420, %425 : vector<8x256xf32>
    %427 = vector.extract_strided_slice %9 {offsets = [0, 53], sizes = [8, 1], strides = [1, 1]} : vector<8x72xf32> to vector<8x1xf32>
    %428 = vector.extract_strided_slice %396 {offsets = [5, 0], sizes = [1, 256], strides = [1, 1]} : vector<8x256xf32> to vector<1x256xf32>
    %429 = vector.broadcast %427 : vector<8x1xf32> to vector<8x256xf32>
    %430 = vector.broadcast %428 : vector<1x256xf32> to vector<8x256xf32>
    %431 = arith.mulf %429, %430 : vector<8x256xf32>
    %432 = arith.addf %426, %431 : vector<8x256xf32>
    %433 = vector.extract_strided_slice %9 {offsets = [0, 54], sizes = [8, 1], strides = [1, 1]} : vector<8x72xf32> to vector<8x1xf32>
    %434 = vector.extract_strided_slice %396 {offsets = [6, 0], sizes = [1, 256], strides = [1, 1]} : vector<8x256xf32> to vector<1x256xf32>
    %435 = vector.broadcast %433 : vector<8x1xf32> to vector<8x256xf32>
    %436 = vector.broadcast %434 : vector<1x256xf32> to vector<8x256xf32>
    %437 = arith.mulf %435, %436 : vector<8x256xf32>
    %438 = arith.addf %432, %437 : vector<8x256xf32>
    %439 = vector.extract_strided_slice %9 {offsets = [0, 55], sizes = [8, 1], strides = [1, 1]} : vector<8x72xf32> to vector<8x1xf32>
    %440 = vector.extract_strided_slice %396 {offsets = [7, 0], sizes = [1, 256], strides = [1, 1]} : vector<8x256xf32> to vector<1x256xf32>
    %441 = vector.broadcast %439 : vector<8x1xf32> to vector<8x256xf32>
    %442 = vector.broadcast %440 : vector<1x256xf32> to vector<8x256xf32>
    %443 = arith.mulf %441, %442 : vector<8x256xf32>
    %444 = arith.addf %438, %443 : vector<8x256xf32>
    %c240_i32_40 = arith.constant 240 : i32
    %445 = tpu.dynamic_rotate %83 by %c240_i32_40 dim 1 : vector<8x256xf32>, i32 -> vector<8x256xf32>
    %c7_41 = arith.constant 7 : index
    %c0_42 = arith.constant 0 : index
    %446 = vector.load %arg3[%c7_41, %c0_42] : memref<9x256xf32, #tpu.memory_space<vmem>>, vector<1x256xf32>
    %447 = vector.broadcast %446 : vector<1x256xf32> to vector<8x256xf32>
    %448 = arith.mulf %445, %447 : vector<8x256xf32>
    %449 = vector.extract_strided_slice %9 {offsets = [0, 56], sizes = [8, 1], strides = [1, 1]} : vector<8x72xf32> to vector<8x1xf32>
    %450 = vector.extract_strided_slice %448 {offsets = [0, 0], sizes = [1, 256], strides = [1, 1]} : vector<8x256xf32> to vector<1x256xf32>
    %451 = vector.broadcast %449 : vector<8x1xf32> to vector<8x256xf32>
    %452 = vector.broadcast %450 : vector<1x256xf32> to vector<8x256xf32>
    %453 = arith.mulf %451, %452 : vector<8x256xf32>
    %454 = arith.addf %444, %453 : vector<8x256xf32>
    %455 = vector.extract_strided_slice %9 {offsets = [0, 57], sizes = [8, 1], strides = [1, 1]} : vector<8x72xf32> to vector<8x1xf32>
    %456 = vector.extract_strided_slice %448 {offsets = [1, 0], sizes = [1, 256], strides = [1, 1]} : vector<8x256xf32> to vector<1x256xf32>
    %457 = vector.broadcast %455 : vector<8x1xf32> to vector<8x256xf32>
    %458 = vector.broadcast %456 : vector<1x256xf32> to vector<8x256xf32>
    %459 = arith.mulf %457, %458 : vector<8x256xf32>
    %460 = arith.addf %454, %459 : vector<8x256xf32>
    %461 = vector.extract_strided_slice %9 {offsets = [0, 58], sizes = [8, 1], strides = [1, 1]} : vector<8x72xf32> to vector<8x1xf32>
    %462 = vector.extract_strided_slice %448 {offsets = [2, 0], sizes = [1, 256], strides = [1, 1]} : vector<8x256xf32> to vector<1x256xf32>
    %463 = vector.broadcast %461 : vector<8x1xf32> to vector<8x256xf32>
    %464 = vector.broadcast %462 : vector<1x256xf32> to vector<8x256xf32>
    %465 = arith.mulf %463, %464 : vector<8x256xf32>
    %466 = arith.addf %460, %465 : vector<8x256xf32>
    %467 = vector.extract_strided_slice %9 {offsets = [0, 59], sizes = [8, 1], strides = [1, 1]} : vector<8x72xf32> to vector<8x1xf32>
    %468 = vector.extract_strided_slice %448 {offsets = [3, 0], sizes = [1, 256], strides = [1, 1]} : vector<8x256xf32> to vector<1x256xf32>
    %469 = vector.broadcast %467 : vector<8x1xf32> to vector<8x256xf32>
    %470 = vector.broadcast %468 : vector<1x256xf32> to vector<8x256xf32>
    %471 = arith.mulf %469, %470 : vector<8x256xf32>
    %472 = arith.addf %466, %471 : vector<8x256xf32>
    %473 = vector.extract_strided_slice %9 {offsets = [0, 60], sizes = [8, 1], strides = [1, 1]} : vector<8x72xf32> to vector<8x1xf32>
    %474 = vector.extract_strided_slice %448 {offsets = [4, 0], sizes = [1, 256], strides = [1, 1]} : vector<8x256xf32> to vector<1x256xf32>
    %475 = vector.broadcast %473 : vector<8x1xf32> to vector<8x256xf32>
    %476 = vector.broadcast %474 : vector<1x256xf32> to vector<8x256xf32>
    %477 = arith.mulf %475, %476 : vector<8x256xf32>
    %478 = arith.addf %472, %477 : vector<8x256xf32>
    %479 = vector.extract_strided_slice %9 {offsets = [0, 61], sizes = [8, 1], strides = [1, 1]} : vector<8x72xf32> to vector<8x1xf32>
    %480 = vector.extract_strided_slice %448 {offsets = [5, 0], sizes = [1, 256], strides = [1, 1]} : vector<8x256xf32> to vector<1x256xf32>
    %481 = vector.broadcast %479 : vector<8x1xf32> to vector<8x256xf32>
    %482 = vector.broadcast %480 : vector<1x256xf32> to vector<8x256xf32>
    %483 = arith.mulf %481, %482 : vector<8x256xf32>
    %484 = arith.addf %478, %483 : vector<8x256xf32>
    %485 = vector.extract_strided_slice %9 {offsets = [0, 62], sizes = [8, 1], strides = [1, 1]} : vector<8x72xf32> to vector<8x1xf32>
    %486 = vector.extract_strided_slice %448 {offsets = [6, 0], sizes = [1, 256], strides = [1, 1]} : vector<8x256xf32> to vector<1x256xf32>
    %487 = vector.broadcast %485 : vector<8x1xf32> to vector<8x256xf32>
    %488 = vector.broadcast %486 : vector<1x256xf32> to vector<8x256xf32>
    %489 = arith.mulf %487, %488 : vector<8x256xf32>
    %490 = arith.addf %484, %489 : vector<8x256xf32>
    %491 = vector.extract_strided_slice %9 {offsets = [0, 63], sizes = [8, 1], strides = [1, 1]} : vector<8x72xf32> to vector<8x1xf32>
    %492 = vector.extract_strided_slice %448 {offsets = [7, 0], sizes = [1, 256], strides = [1, 1]} : vector<8x256xf32> to vector<1x256xf32>
    %493 = vector.broadcast %491 : vector<8x1xf32> to vector<8x256xf32>
    %494 = vector.broadcast %492 : vector<1x256xf32> to vector<8x256xf32>
    %495 = arith.mulf %493, %494 : vector<8x256xf32>
    %496 = arith.addf %490, %495 : vector<8x256xf32>
    %c239_i32_43 = arith.constant 239 : i32
    %497 = tpu.dynamic_rotate %83 by %c239_i32_43 dim 1 : vector<8x256xf32>, i32 -> vector<8x256xf32>
    %c8_44 = arith.constant 8 : index
    %c0_45 = arith.constant 0 : index
    %498 = vector.load %arg3[%c8_44, %c0_45] : memref<9x256xf32, #tpu.memory_space<vmem>>, vector<1x256xf32>
    %499 = vector.broadcast %498 : vector<1x256xf32> to vector<8x256xf32>
    %500 = arith.mulf %497, %499 : vector<8x256xf32>
    %501 = vector.extract_strided_slice %9 {offsets = [0, 64], sizes = [8, 1], strides = [1, 1]} : vector<8x72xf32> to vector<8x1xf32>
    %502 = vector.extract_strided_slice %500 {offsets = [0, 0], sizes = [1, 256], strides = [1, 1]} : vector<8x256xf32> to vector<1x256xf32>
    %503 = vector.broadcast %501 : vector<8x1xf32> to vector<8x256xf32>
    %504 = vector.broadcast %502 : vector<1x256xf32> to vector<8x256xf32>
    %505 = arith.mulf %503, %504 : vector<8x256xf32>
    %506 = arith.addf %496, %505 : vector<8x256xf32>
    %507 = vector.extract_strided_slice %9 {offsets = [0, 65], sizes = [8, 1], strides = [1, 1]} : vector<8x72xf32> to vector<8x1xf32>
    %508 = vector.extract_strided_slice %500 {offsets = [1, 0], sizes = [1, 256], strides = [1, 1]} : vector<8x256xf32> to vector<1x256xf32>
    %509 = vector.broadcast %507 : vector<8x1xf32> to vector<8x256xf32>
    %510 = vector.broadcast %508 : vector<1x256xf32> to vector<8x256xf32>
    %511 = arith.mulf %509, %510 : vector<8x256xf32>
    %512 = arith.addf %506, %511 : vector<8x256xf32>
    %513 = vector.extract_strided_slice %9 {offsets = [0, 66], sizes = [8, 1], strides = [1, 1]} : vector<8x72xf32> to vector<8x1xf32>
    %514 = vector.extract_strided_slice %500 {offsets = [2, 0], sizes = [1, 256], strides = [1, 1]} : vector<8x256xf32> to vector<1x256xf32>
    %515 = vector.broadcast %513 : vector<8x1xf32> to vector<8x256xf32>
    %516 = vector.broadcast %514 : vector<1x256xf32> to vector<8x256xf32>
    %517 = arith.mulf %515, %516 : vector<8x256xf32>
    %518 = arith.addf %512, %517 : vector<8x256xf32>
    %519 = vector.extract_strided_slice %9 {offsets = [0, 67], sizes = [8, 1], strides = [1, 1]} : vector<8x72xf32> to vector<8x1xf32>
    %520 = vector.extract_strided_slice %500 {offsets = [3, 0], sizes = [1, 256], strides = [1, 1]} : vector<8x256xf32> to vector<1x256xf32>
    %521 = vector.broadcast %519 : vector<8x1xf32> to vector<8x256xf32>
    %522 = vector.broadcast %520 : vector<1x256xf32> to vector<8x256xf32>
    %523 = arith.mulf %521, %522 : vector<8x256xf32>
    %524 = arith.addf %518, %523 : vector<8x256xf32>
    %525 = vector.extract_strided_slice %9 {offsets = [0, 68], sizes = [8, 1], strides = [1, 1]} : vector<8x72xf32> to vector<8x1xf32>
    %526 = vector.extract_strided_slice %500 {offsets = [4, 0], sizes = [1, 256], strides = [1, 1]} : vector<8x256xf32> to vector<1x256xf32>
    %527 = vector.broadcast %525 : vector<8x1xf32> to vector<8x256xf32>
    %528 = vector.broadcast %526 : vector<1x256xf32> to vector<8x256xf32>
    %529 = arith.mulf %527, %528 : vector<8x256xf32>
    %530 = arith.addf %524, %529 : vector<8x256xf32>
    %531 = vector.extract_strided_slice %9 {offsets = [0, 69], sizes = [8, 1], strides = [1, 1]} : vector<8x72xf32> to vector<8x1xf32>
    %532 = vector.extract_strided_slice %500 {offsets = [5, 0], sizes = [1, 256], strides = [1, 1]} : vector<8x256xf32> to vector<1x256xf32>
    %533 = vector.broadcast %531 : vector<8x1xf32> to vector<8x256xf32>
    %534 = vector.broadcast %532 : vector<1x256xf32> to vector<8x256xf32>
    %535 = arith.mulf %533, %534 : vector<8x256xf32>
    %536 = arith.addf %530, %535 : vector<8x256xf32>
    %537 = vector.extract_strided_slice %9 {offsets = [0, 70], sizes = [8, 1], strides = [1, 1]} : vector<8x72xf32> to vector<8x1xf32>
    %538 = vector.extract_strided_slice %500 {offsets = [6, 0], sizes = [1, 256], strides = [1, 1]} : vector<8x256xf32> to vector<1x256xf32>
    %539 = vector.broadcast %537 : vector<8x1xf32> to vector<8x256xf32>
    %540 = vector.broadcast %538 : vector<1x256xf32> to vector<8x256xf32>
    %541 = arith.mulf %539, %540 : vector<8x256xf32>
    %542 = arith.addf %536, %541 : vector<8x256xf32>
    %543 = vector.extract_strided_slice %9 {offsets = [0, 71], sizes = [8, 1], strides = [1, 1]} : vector<8x72xf32> to vector<8x1xf32>
    %544 = vector.extract_strided_slice %500 {offsets = [7, 0], sizes = [1, 256], strides = [1, 1]} : vector<8x256xf32> to vector<1x256xf32>
    %545 = vector.broadcast %543 : vector<8x1xf32> to vector<8x256xf32>
    %546 = vector.broadcast %544 : vector<1x256xf32> to vector<8x256xf32>
    %547 = arith.mulf %545, %546 : vector<8x256xf32>
    %548 = arith.addf %542, %547 : vector<8x256xf32>
    %c0_46 = arith.constant 0 : index
    %c0_47 = arith.constant 0 : index
    %549 = vector.load %arg7[%c0_46, %c0_47] : memref<8x1xf32, #tpu.memory_space<vmem>>, vector<8x1xf32>
    %550 = vector.broadcast %549 : vector<8x1xf32> to vector<8x256xf32>
    %551 = arith.addf %548, %550 : vector<8x256xf32>
    %c0_48 = arith.constant 0 : index
    %c0_49 = arith.constant 0 : index
    %c0_50 = arith.constant 0 : index
    %552 = vector.load %arg8[%c0_48, %c0_49, %c0_50] : memref<1x8x256xf32, #tpu.memory_space<vmem>>, vector<1x8x256xf32>
    %553 = vector.shape_cast %552 : vector<1x8x256xf32> to vector<8x256xf32>
    %554 = vector.shape_cast %551 : vector<8x256xf32> to vector<1x8x256xf32>
    tpu.vector_store %arg8[%c0_48, %c0_49, %c0_50], %554 {strides = array<i32>} : memref<1x8x256xf32, #tpu.memory_space<vmem>>, vector<1x8x256xf32>,
    return
  }
  func.func @transform_0(%arg0: i32) -> (i32, i32, i32) {
    %c0_i32 = arith.constant 0 : i32
    %c0_i32_0 = arith.constant 0 : i32
    %c0_i32_1 = arith.constant 0 : i32
    return %arg0, %c0_i32, %c0_i32_0 : i32, i32, i32
  }
  func.func @transform_1(%arg0: i32) -> (i32, i32) {
    %c0_i32 = arith.constant 0 : i32
    %c0_i32_0 = arith.constant 0 : i32
    %c0_i32_1 = arith.constant 0 : i32
    return %c0_i32, %c0_i32_0 : i32, i32
  }
  func.func @transform_2(%arg0: i32) -> (i32, i32) {
    %c0_i32 = arith.constant 0 : i32
    %c0_i32_0 = arith.constant 0 : i32
    %c0_i32_1 = arith.constant 0 : i32
    return %c0_i32, %c0_i32_0 : i32, i32
  }
  func.func @transform_3(%arg0: i32) -> (i32, i32) {
    %c0_i32 = arith.constant 0 : i32
    %c0_i32_0 = arith.constant 0 : i32
    %c0_i32_1 = arith.constant 0 : i32
    return %c0_i32, %c0_i32_0 : i32, i32
  }
  func.func @transform_4(%arg0: i32) -> (i32, i32) {
    %c0_i32 = arith.constant 0 : i32
    %c0_i32_0 = arith.constant 0 : i32
    %c0_i32_1 = arith.constant 0 : i32
    return %c0_i32, %c0_i32_0 : i32, i32
  }
  func.func @transform_5(%arg0: i32) -> (i32, i32) {
    %c0_i32 = arith.constant 0 : i32
    %c0_i32_0 = arith.constant 0 : i32
    %c0_i32_1 = arith.constant 0 : i32
    return %c0_i32, %c0_i32_0 : i32, i32
  }
  func.func @transform_6(%arg0: i32) -> (i32, i32) {
    %c0_i32 = arith.constant 0 : i32
    %c0_i32_0 = arith.constant 0 : i32
    %c0_i32_1 = arith.constant 0 : i32
    return %c0_i32, %c0_i32_0 : i32, i32
  }
  func.func @transform_7(%arg0: i32) -> (i32, i32, i32) {
    %c0_i32 = arith.constant 0 : i32
    %c0_i32_0 = arith.constant 0 : i32
    %c0_i32_1 = arith.constant 0 : i32
    return %arg0, %c0_i32, %c0_i32_0 : i32, i32, i32
  }
}

</mosaic_0001>

<llo_original>
// kernel: tpu_custom_call.1
$region0: #{tpu_custom_call.1}
  #allocation0 [shape = 'u32[]', space=smem, size = 0x4, offset = 0x4, fixed_abs, tag = 'smem constant byte address 0x4 - core index']
  #allocation1 [shape = 'u32[144,128]{1,0:T(1,128)}', space=vmem, size = 0x12000, scoped, tag = 'internal scratch']
  %s0 = inlined_call_operand.hbm [shape: f32[2,8,256], index: 0, kind: input, shape index: {}]
  %s1 = inlined_call_operand.vmem [shape: f32[8,256], index: 1, kind: input, shape index: {}]
  %s2 = inlined_call_operand.hbm [shape: f32[9,256], index: 2, kind: input, shape index: {}]
  %s3 = inlined_call_operand.hbm [shape: f32[8,9], index: 3, kind: input, shape index: {}]
  %s4 = inlined_call_operand.vmem [shape: f32[8,1], index: 4, kind: input, shape index: {}]
  %s5 = inlined_call_operand.vmem [shape: f32[8,72], index: 5, kind: input, shape index: {}]
  %s6 = inlined_call_operand.vmem [shape: f32[8,1], index: 6, kind: input, shape index: {}]
  %s7 = inlined_call_operand.hbm [shape: f32[2,8,256], index: 7, kind: output, shape index: {}]
  %s8 = sld [smem:[#allocation0]]
  $region73: #{tpu_custom_call.1} parent=0
    _
  %s10 = ssub.s32 1, %s8
  %s11 = scalar_select 0, %s10, %s8
  $region1: #{tpu_custom_call.1} parent=0
    #allocation2 [shape = 'u8[16384]{0}', space=vmem, size = 0x4000, scoped, tag = 'input window, operand 0']
    #allocation3 [shape = 's32[2]{0}', space=sflag, size = 0x8, scoped, tag = 'scoped memory for tpu_custom_call.1']
    #allocation4 [shape = 's32[2]{0}', space=sflag, size = 0x8, scoped, tag = 'scoped memory for tpu_custom_call.1']
    #allocation5 [shape = 'u8[16384]{0}', space=vmem, size = 0x4000, scoped, tag = 'input window, operand 2, single buffered']
    #allocation6 [shape = 's32[1]{0}', space=sflag, size = 0x4, scoped, tag = 'scoped memory for tpu_custom_call.1']
    #allocation7 [shape = 'u8[4096]{0}', space=vmem, size = 0x1000, scoped, tag = 'input window, operand 3, single buffered']
    #allocation8 [shape = 'u8[16384]{0}', space=vmem, size = 0x4000, scoped, tag = 'output window, operand 0']
    %12 = vsyncpa [#allocation3], 0
    %s13 = scalar_lea.sflag [#allocation3], 1
    %14 = vsyncpa %s13, 0
    %15 = vsyncpa [#allocation6], 0
    %16 = vsyncpa [#allocation4], 0
    %s17 = scalar_lea.sflag [#allocation4], 1
    %18 = vsyncpa %s17, 0
    loop: start=0, step=1, limit=4
    $region2: #{tpu_custom_call.1} parent=1 // loop_pre_header
      _
    $region3: #{tpu_custom_call.1} parent=1 // loop_header
      %s20 = sphi 0, %s24
      %p21 = scmp.ge.s32.totalorder %s20, 4
      %s30 = sphi 0, %s32
      %s33 = sphi 0, %s30
      %s34 = sphi 0, %s33
      %s50 = sphi 0, %s34
      %s54 = sphi 0, %s54
      %s56 = sphi 0, %s54
      %s57 = sphi 0, %s56
      %s71 = sphi 0, %s57
      %s75 = sphi 0, %s75
      %s77 = sphi 0, %s75
      %s78 = sphi 0, %s77
      %s92 = sphi 0, %s78
      %s96 = sphi 0, %s96
      %s98 = sphi 0, %s96
      %s99 = sphi 0, %s98
      %s113 = sphi 0, %s99
      %s117 = sphi 0, %s117
      %s119 = sphi 0, %s117
      %s120 = sphi 0, %s119
      %s134 = sphi 0, %s120
      %s138 = sphi 0, %s138
      %s140 = sphi 0, %s138
      %s141 = sphi 0, %s140
      %s155 = sphi 0, %s141
      %s159 = sphi 0, %s159
      %s161 = sphi 0, %s159
      %s162 = sphi 0, %s161
      %s176 = sphi 0, %s162
      %s182 = sphi 0, %s184
      %s185 = sphi 0, %s182
      %s186 = sphi 0, %s185
      %s202 = sphi 0, %s186
    $region4: #{tpu_custom_call.1} parent=1 // loop_header_branch
      %23 = sbr.rel (%p21) target = $region8
    $region5: #{tpu_custom_call.1} parent=1 // loop_body
      %s25 = ssub.s32 %s20, 1
      %s26 = ssub.s32 %s20, 2
      %s27 = sadd.s32 %s20, 1
      %s28 = ssub.s32 %s20, %s27
      %p29 = scmp.eq.s32.totalorder %s28, 0
      %s31 = sadd.s32 %s30, 1
      %s32 = scalar_select %p29, %s30, %s31
      %p35 = pneg %p29
      %p36 = scmp.eq.s32.totalorder %s20, 1
      %p37 = por %p35, %p36
      %p38 = scmp.ne.s32.totalorder %s30, %s33
      %p39 = scmp.eq.s32.totalorder %s20, 0
      %p40 = por %p38, %p39
      %p41 = scmp.ne.s32.totalorder %s30, %s33
      %p42 = scmp.eq.s32.totalorder %s25, 1
      %p43 = por %p41, %p42
      %p44 = scmp.ne.s32.totalorder %s33, %s34
      %p45 = scmp.eq.s32.totalorder %s25, 0
      %p46 = por %p44, %p45
      %p47 = scmp.ne.s32.totalorder %s33, %s34
      %p48 = scmp.eq.s32.totalorder %s26, 1
      %p49 = por %p47, %p48
      %p51 = scmp.ne.s32.totalorder %s34, %s50
      %p52 = scmp.eq.s32.totalorder %s26, 0
      %p53 = por %p51, %p52
      %s55 = sadd.s32 %s54, 1
      %p58 = scmp.eq.s32.totalorder %s20, 1
      %p59 = scmp.ne.s32.totalorder %s54, %s56
      %p60 = scmp.eq.s32.totalorder %s20, 0
      %p61 = por %p59, %p60
      %p62 = scmp.ne.s32.totalorder %s54, %s56
      %p63 = scmp.eq.s32.totalorder %s25, 1
      %p64 = por %p62, %p63
      %p65 = scmp.ne.s32.totalorder %s56, %s57
      %p66 = scmp.eq.s32.totalorder %s25, 0
      %p67 = por %p65, %p66
      %p68 = scmp.ne.s32.totalorder %s56, %s57
      %p69 = scmp.eq.s32.totalorder %s26, 1
      %p70 = por %p68, %p69
      %p72 = scmp.ne.s32.totalorder %s57, %s71
      %p73 = scmp.eq.s32.totalorder %s26, 0
      %p74 = por %p72, %p73
      %s76 = sadd.s32 %s75, 1
      %p79 = scmp.eq.s32.totalorder %s20, 1
      %p80 = scmp.ne.s32.totalorder %s75, %s77
      %p81 = scmp.eq.s32.totalorder %s20, 0
      %p82 = por %p80, %p81
      %p83 = scmp.ne.s32.totalorder %s75, %s77
      %p84 = scmp.eq.s32.totalorder %s25, 1
      %p85 = por %p83, %p84
      %p86 = scmp.ne.s32.totalorder %s77, %s78
      %p87 = scmp.eq.s32.totalorder %s25, 0
      %p88 = por %p86, %p87
      %p89 = scmp.ne.s32.totalorder %s77, %s78
      %p90 = scmp.eq.s32.totalorder %s26, 1
      %p91 = por %p89, %p90
      %p93 = scmp.ne.s32.totalorder %s78, %s92
      %p94 = scmp.eq.s32.totalorder %s26, 0
      %p95 = por %p93, %p94
      %s97 = sadd.s32 %s96, 1
      %p100 = scmp.eq.s32.totalorder %s20, 1
      %p101 = scmp.ne.s32.totalorder %s96, %s98
      %p102 = scmp.eq.s32.totalorder %s20, 0
      %p103 = por %p101, %p102
      %p104 = scmp.ne.s32.totalorder %s96, %s98
      %p105 = scmp.eq.s32.totalorder %s25, 1
      %p106 = por %p104, %p105
      %p107 = scmp.ne.s32.totalorder %s98, %s99
      %p108 = scmp.eq.s32.totalorder %s25, 0
      %p109 = por %p107, %p108
      %p110 = scmp.ne.s32.totalorder %s98, %s99
      %p111 = scmp.eq.s32.totalorder %s26, 1
      %p112 = por %p110, %p111
      %p114 = scmp.ne.s32.totalorder %s99, %s113
      %p115 = scmp.eq.s32.totalorder %s26, 0
      %p116 = por %p114, %p115
      %s118 = sadd.s32 %s117, 1
      %p121 = scmp.eq.s32.totalorder %s20, 1
      %p122 = scmp.ne.s32.totalorder %s117, %s119
      %p123 = scmp.eq.s32.totalorder %s20, 0
      %p124 = por %p122, %p123
      %p125 = scmp.ne.s32.totalorder %s117, %s119
      %p126 = scmp.eq.s32.totalorder %s25, 1
      %p127 = por %p125, %p126
      %p128 = scmp.ne.s32.totalorder %s119, %s120
      %p129 = scmp.eq.s32.totalorder %s25, 0
      %p130 = por %p128, %p129
      %p131 = scmp.ne.s32.totalorder %s119, %s120
      %p132 = scmp.eq.s32.totalorder %s26, 1
      %p133 = por %p131, %p132
      %p135 = scmp.ne.s32.totalorder %s120, %s134
      %p136 = scmp.eq.s32.totalorder %s26, 0
      %p137 = por %p135, %p136
      %s139 = sadd.s32 %s138, 1
      %p142 = scmp.eq.s32.totalorder %s20, 1
      %p143 = scmp.ne.s32.totalorder %s138, %s140
      %p144 = scmp.eq.s32.totalorder %s20, 0
      %p145 = por %p143, %p144
      %p146 = scmp.ne.s32.totalorder %s138, %s140
      %p147 = scmp.eq.s32.totalorder %s25, 1
      %p148 = por %p146, %p147
      %p149 = scmp.ne.s32.totalorder %s140, %s141
      %p150 = scmp.eq.s32.totalorder %s25, 0
      %p151 = por %p149, %p150
      %p152 = scmp.ne.s32.totalorder %s140, %s141
      %p153 = scmp.eq.s32.totalorder %s26, 1
      %p154 = por %p152, %p153
      %p156 = scmp.ne.s32.totalorder %s141, %s155
      %p157 = scmp.eq.s32.totalorder %s26, 0
      %p158 = por %p156, %p157
      %s160 = sadd.s32 %s159, 1
      %p163 = scmp.eq.s32.totalorder %s20, 1
      %p164 = scmp.ne.s32.totalorder %s159, %s161
      %p165 = scmp.eq.s32.totalorder %s20, 0
      %p166 = por %p164, %p165
      %p167 = scmp.ne.s32.totalorder %s159, %s161
      %p168 = scmp.eq.s32.totalorder %s25, 1
      %p169 = por %p167, %p168
      %p170 = scmp.ne.s32.totalorder %s161, %s162
      %p171 = scmp.eq.s32.totalorder %s25, 0
      %p172 = por %p170, %p171
      %p173 = scmp.ne.s32.totalorder %s161, %s162
      %p174 = scmp.eq.s32.totalorder %s26, 1
      %p175 = por %p173, %p174
      %p177 = scmp.ne.s32.totalorder %s162, %s176
      %p178 = scmp.eq.s32.totalorder %s26, 0
      %p179 = por %p177, %p178
      %s180 = ssub.s32 %s20, %s27
      %p181 = scmp.eq.s32.totalorder %s180, 0
      %s183 = sadd.s32 %s182, 1
      %s184 = scalar_select %p181, %s182, %s183
      %p187 = pneg %p181
      %p188 = scmp.eq.s32.totalorder %s20, 1
      %p189 = por %p187, %p188
      %p190 = scmp.ne.s32.totalorder %s182, %s185
      %p191 = scmp.eq.s32.totalorder %s20, 0
      %p192 = por %p190, %p191
      %p193 = scmp.ne.s32.totalorder %s182, %s185
      %p194 = scmp.eq.s32.totalorder %s25, 1
      %p195 = por %p193, %p194
      %p196 = scmp.ne.s32.totalorder %s185, %s186
      %p197 = scmp.eq.s32.totalorder %s25, 0
      %p198 = por %p196, %p197
      %p199 = scmp.ne.s32.totalorder %s185, %s186
      %p200 = scmp.eq.s32.totalorder %s26, 1
      %p201 = por %p199, %p200
      %p203 = scmp.ne.s32.totalorder %s186, %s202
      %p204 = scmp.eq.s32.totalorder %s26, 0
      %p205 = por %p203, %p204
      %p206 = scmp.le.s32.totalorder 1, %s20
      %p207 = scmp.lt.s32.totalorder %s20, 3
      %p208 = pnand %p206, %p207
      %p209 = pneg %p208
      // Predicated region
      $region9: #{tpu_custom_call.1} parent=5 // pred_check
        _
      $region10: #{tpu_custom_call.1} parent=5 // pred_check_branch
        %211 = sbr.rel (%p208) target = $region12
      $region11: #{tpu_custom_call.1} parent=5 // pred_region
        %s212 = ssub.s32 %s20, 1
        // Predicated region
        $region13: #{tpu_custom_call.1} parent=11 // pred_check
          %p213 = pneg %p67
        $region14: #{tpu_custom_call.1} parent=11 // pred_check_branch
          %215 = sbr.rel (%p213) target = $region16
        $region15: #{tpu_custom_call.1} parent=11 // pred_region
          _
        $region16: #{tpu_custom_call.1} parent=11 // pred_fallthru
          _
        // Predicated region
        $region17: #{tpu_custom_call.1} parent=11 // pred_check
          %p216 = pneg %p88
        $region18: #{tpu_custom_call.1} parent=11 // pred_check_branch
          %218 = sbr.rel (%p216) target = $region20
        $region19: #{tpu_custom_call.1} parent=11 // pred_region
          %s220 = ssub.s32 512, 512
          %221 = vsyncadd [#allocation6], %s220
          %s222 = sshll.u32 [#allocation5], 4
          %s223 = int_to_ptr.vmem [resolvable:$true] %s222
          %228 = dma.hbm_to_vmem [thread:$0]  %s2, 512, %s223, [#allocation6], 256, 256, 16
        $region20: #{tpu_custom_call.1} parent=11 // pred_fallthru
          _
        // Predicated region
        $region21: #{tpu_custom_call.1} parent=11 // pred_check
          %p229 = pneg %p109
        $region22: #{tpu_custom_call.1} parent=11 // pred_check_branch
          %231 = sbr.rel (%p229) target = $region24
        $region23: #{tpu_custom_call.1} parent=11 // pred_region
          %s233 = ssub.s32 128, 128
          %234 = vsyncadd [#allocation6], %s233
          %s236 = sshll.u32 [#allocation7], 4
          %s237 = int_to_ptr.vmem [resolvable:$true] %s236
          %239 = dma.hbm_to_vmem [thread:$0]  %s3, 128, %s237, [#allocation6]
        $region24: #{tpu_custom_call.1} parent=11 // pred_fallthru
          _
        // Predicated region
        $region25: #{tpu_custom_call.1} parent=11 // pred_check
          %p240 = pneg %p130
        $region26: #{tpu_custom_call.1} parent=11 // pred_check_branch
          %242 = sbr.rel (%p240) target = $region28
        $region27: #{tpu_custom_call.1} parent=11 // pred_region
          _
        $region28: #{tpu_custom_call.1} parent=11 // pred_fallthru
          _
        // Predicated region
        $region29: #{tpu_custom_call.1} parent=11 // pred_check
          %p243 = pneg %p151
        $region30: #{tpu_custom_call.1} parent=11 // pred_check_branch
          %245 = sbr.rel (%p243) target = $region32
        $region31: #{tpu_custom_call.1} parent=11 // pred_region
          _
        $region32: #{tpu_custom_call.1} parent=11 // pred_fallthru
          _
        // Predicated region
        $region33: #{tpu_custom_call.1} parent=11 // pred_check
          %p246 = pneg %p172
        $region34: #{tpu_custom_call.1} parent=11 // pred_check_branch
          %248 = sbr.rel (%p246) target = $region36
        $region35: #{tpu_custom_call.1} parent=11 // pred_region
          _
        $region36: #{tpu_custom_call.1} parent=11 // pred_fallthru
          _
      $region12: #{tpu_custom_call.1} parent=5 // pred_fallthru
        _
      %p249 = scmp.lt.s32.totalorder %s20, 2
      // Predicated region
      $region37: #{tpu_custom_call.1} parent=5 // pred_check
        %p250 = pneg %p249
      $region38: #{tpu_custom_call.1} parent=5 // pred_check_branch
        %252 = sbr.rel (%p250) target = $region40
      $region39: #{tpu_custom_call.1} parent=5 // pred_region
        // Predicated region
        $region41: #{tpu_custom_call.1} parent=39 // pred_check
          %p253 = pneg %p40
        $region42: #{tpu_custom_call.1} parent=39 // pred_check_branch
          %255 = sbr.rel (%p253) target = $region44
        $region43: #{tpu_custom_call.1} parent=39 // pred_region
          %s256 = sand.u32 %s30, 1
          %s257 = scalar_lea.sflag [#allocation3], %s256
          %s258 = sand.u32 %s30, 1
          %s259 = smul.addr %s258, 16
          %s260 = scalar_lea.vmem [#allocation2], %s259
          %s262 = ssub.s32 256, 256
          %263 = vsyncadd %s257, %s262
          %s264 = smul.addr %s20, 2
          %s265 = smul.addr %s264, 128
          %s266 = scalar_lea.hbm %s0, %s265
          %s268 = sshll.u32 %s260, 4
          %s269 = int_to_ptr.vmem [resolvable:$true] %s268
          %271 = dma.hbm_to_vmem [thread:$0]  %s266, 256, %s269, %s257
        $region44: #{tpu_custom_call.1} parent=39 // pred_fallthru
          _
      $region40: #{tpu_custom_call.1} parent=5 // pred_fallthru
        _
      %p272 = scmp.le.s32.totalorder 1, %s20
      %p273 = scmp.lt.s32.totalorder %s20, 3
      %p274 = pnand %p272, %p273
      %p275 = pneg %p274
      // Predicated region
      $region45: #{tpu_custom_call.1} parent=5 // pred_check
        _
      $region46: #{tpu_custom_call.1} parent=5 // pred_check_branch
        %277 = sbr.rel (%p274) target = $region48
      $region47: #{tpu_custom_call.1} parent=5 // pred_region
        %s278 = ssub.s32 %s20, 1
        %s279 = sand.u32 %s33, 1
        %s280 = scalar_lea.sflag [#allocation3], %s279
        %s281 = sand.u32 %s33, 1
        %s282 = smul.addr %s281, 16
        %s283 = scalar_lea.vmem [#allocation2], %s282
        // Predicated region
        $region49: #{tpu_custom_call.1} parent=47 // pred_check
          %p284 = pneg %p46
        $region50: #{tpu_custom_call.1} parent=47 // pred_check_branch
          %286 = sbr.rel (%p284) target = $region52
        $region51: #{tpu_custom_call.1} parent=47 // pred_region
          %287 = dma.done %s280, 256
        $region52: #{tpu_custom_call.1} parent=47 // pred_fallthru
          _
        // Predicated region
        $region53: #{tpu_custom_call.1} parent=47 // pred_check
          %p288 = pneg %p88
        $region54: #{tpu_custom_call.1} parent=47 // pred_check_branch
          %290 = sbr.rel (%p288) target = $region56
        $region55: #{tpu_custom_call.1} parent=47 // pred_region
          %291 = dma.done [#allocation6], 512
        $region56: #{tpu_custom_call.1} parent=47 // pred_fallthru
          _
        // Predicated region
        $region57: #{tpu_custom_call.1} parent=47 // pred_check
          %p292 = pneg %p109
        $region58: #{tpu_custom_call.1} parent=47 // pred_check_branch
          %294 = sbr.rel (%p292) target = $region60
        $region59: #{tpu_custom_call.1} parent=47 // pred_region
          %295 = dma.done [#allocation6], 128
        $region60: #{tpu_custom_call.1} parent=47 // pred_fallthru
          _
        %s296 = sand.u32 %s33, 1
        %s297 = scalar_lea.sflag [#allocation3], %s296
        %s298 = sand.u32 %s33, 1
        %s299 = smul.addr %s298, 16
        %s300 = scalar_lea.vmem [#allocation2], %s299
        %p301 = pneg %p46
        %p302 = pneg %p43
        %p303 = pneg %p67
        %p304 = pneg %p64
        %p305 = pneg %p88
        %p306 = pneg %p85
        %p307 = pneg %p109
        %p308 = pneg %p106
        %p309 = pneg %p130
        %p310 = pneg %p127
        %p311 = pneg %p151
        %p312 = pneg %p148
        %p313 = pneg %p172
        %p314 = pneg %p169
        %p315 = pneg %p198
        %p316 = pneg %p195
        %s317 = sand.u32 %s185, 1
        %s318 = scalar_lea.sflag [#allocation4], %s317
        %s319 = sand.u32 %s185, 1
        %s320 = smul.addr %s319, 16
        %s321 = scalar_lea.vmem [#allocation8], %s320
        %v322 = vld [vmem:[%s283] sm:$0xff]
        %v323 = vld [vmem:[%s283 + $0x8] sm:$0xff]
        %v324 = vld [vmem:[%s1] sm:$0xff]
        %v325 = vld [vmem:[%s1 + $0x8] sm:$0xff]
        %v326 = vmul.f32 %v322, %v324
        %v327 = vmul.f32 %v323, %v325
        %v328 = vrot.slane %v326, 4
        %v329 = vadd.f32 %v326, %v328
        %v330 = vrot.slane %v329, 2
        %v331 = vadd.f32 %v329, %v330
        %v332 = vrot.slane %v331, 1
        %v333 = vadd.f32 %v331, %v332
        %v334 = vrot.slane %v327, 4
        %v335 = vadd.f32 %v327, %v334
        %v336 = vrot.slane %v335, 2
        %v337 = vadd.f32 %v335, %v336
        %v338 = vrot.slane %v337, 1
        %v339 = vadd.f32 %v337, %v338
        %v340 = vld [vmem:[#allocation7] sm:$0xff]
        %v341 = vld [vmem:[%s5] sm:$0xff]
        %342 = vrot.lane.b32.xlu0 %v333, 17
        %v343 = vpop.permute.xlu0 %342
        %344 = vrot.lane.b32.xlu0 %v339, 17
        %v345 = vpop.permute.xlu0 %344
        %v346 = vlaneseq
        %v347 = vand.u32 %v346, 127
        %vm348 = vcmp.lt.s32.totalorder %v347, 17
        %v349 = vsel %vm348, %v343, %v345
        %v350 = vsel %vm348, %v345, %v343
        %v351 = vld [vmem:[#allocation5] ss:$8 sm:$0x3]
        %v353 = vlaneseq
        %v354 = vshrl.u32 %v353, 7
        %v355 = vsub.s32 0, %v354
        %v356 = vrot.slane %v351, %v355
        %v357 = vlaneseq
        %v358 = vshrl.u32 %v357, 7
        %v359 = vsub.s32 1, %v358
        %v360 = vrot.slane %v351, %v359
        %v363 = vmul.f32 %v350, %v356
        %v364 = vmul.f32 %v349, %v360
        %366 = vset.pattern.permute.xlu0 0
        %367 = vperm.xlu0 %366, %v340
        %v368 = vpop.permute.xlu0 %367
        %v370 = vmul.f32 %v368, %v363
        %v371 = vmul.f32 %v368, %v364
        %v372 = vadd.f32 %v370, 0.0
        %v373 = vadd.f32 %v371, 0.0
        %374 = vrot.lane.b32.xlu0 %v333, 16
        %v375 = vpop.permute.xlu0 %374
        %376 = vrot.lane.b32.xlu0 %v339, 16
        %v377 = vpop.permute.xlu0 %376
        %vm378 = vcmp.lt.s32.totalorder %v347, 16
        %v379 = vsel %vm378, %v375, %v377
        %v380 = vsel %vm378, %v377, %v375
        %s381 = scalar_lea.vmem [#allocation5], 1
        %v382 = vld [vmem:[%s381] ss:$8 sm:$0x3]
        %v384 = vlaneseq
        %v385 = vshrl.u32 %v384, 7
        %v386 = vsub.s32 0, %v385
        %v387 = vrot.slane %v382, %v386
        %v388 = vlaneseq
        %v389 = vshrl.u32 %v388, 7
        %v390 = vsub.s32 1, %v389
        %v391 = vrot.slane %v382, %v390
        %v394 = vmul.f32 %v380, %v387
        %v395 = vmul.f32 %v379, %v391
        %396 = vset.pattern.permute.xlu0 1
        %397 = vperm.xlu0 %396, %v340
        %v398 = vpop.permute.xlu0 %397
        %v400 = vmul.f32 %v398, %v394
        %v401 = vmul.f32 %v398, %v395
        %v402 = vadd.f32 %v372, %v400
        %v403 = vadd.f32 %v373, %v401
        %404 = vrot.lane.b32.xlu0 %v333, 15
        %v405 = vpop.permute.xlu0 %404
        %406 = vrot.lane.b32.xlu0 %v339, 15
        %v407 = vpop.permute.xlu0 %406
        %vm408 = vcmp.lt.s32.totalorder %v347, 15
        %v409 = vsel %vm408, %v405, %v407
        %v410 = vsel %vm408, %v407, %v405
        %s411 = scalar_lea.vmem [#allocation5], 2
        %v412 = vld [vmem:[%s411] ss:$8 sm:$0x3]
        %v414 = vlaneseq
        %v415 = vshrl.u32 %v414, 7
        %v416 = vsub.s32 0, %v415
        %v417 = vrot.slane %v412, %v416
        %v418 = vlaneseq
        %v419 = vshrl.u32 %v418, 7
        %v420 = vsub.s32 1, %v419
        %v421 = vrot.slane %v412, %v420
        %v424 = vmul.f32 %v410, %v417
        %v425 = vmul.f32 %v409, %v421
        %426 = vset.pattern.permute.xlu0 2
        %427 = vperm.xlu0 %426, %v340
        %v428 = vpop.permute.xlu0 %427
        %v430 = vmul.f32 %v428, %v424
        %v431 = vmul.f32 %v428, %v425
        %v432 = vadd.f32 %v402, %v430
        %v433 = vadd.f32 %v403, %v431
        %434 = vrot.lane.b32.xlu0 %v333, 1
        %v435 = vpop.permute.xlu0 %434
        %436 = vrot.lane.b32.xlu0 %v339, 1
        %v437 = vpop.permute.xlu0 %436
        %vm438 = vcmp.lt.s32.totalorder %v347, 1
        %v439 = vsel %vm438, %v435, %v437
        %v440 = vsel %vm438, %v437, %v435
        %s441 = scalar_lea.vmem [#allocation5], 3
        %v442 = vld [vmem:[%s441] ss:$8 sm:$0x3]
        %v444 = vlaneseq
        %v445 = vshrl.u32 %v444, 7
        %v446 = vsub.s32 0, %v445
        %v447 = vrot.slane %v442, %v446
        %v448 = vlaneseq
        %v449 = vshrl.u32 %v448, 7
        %v450 = vsub.s32 1, %v449
        %v451 = vrot.slane %v442, %v450
        %v454 = vmul.f32 %v440, %v447
        %v455 = vmul.f32 %v439, %v451
        %456 = vset.pattern.permute.xlu0 3
        %457 = vperm.xlu0 %456, %v340
        %v458 = vpop.permute.xlu0 %457
        %v460 = vmul.f32 %v458, %v454
        %v461 = vmul.f32 %v458, %v455
        %v462 = vadd.f32 %v432, %v460
        %v463 = vadd.f32 %v433, %v461
        %464 = vset.pattern.permute.xlu0 4
        %465 = vperm.xlu0 %464, %v340
        %v466 = vpop.permute.xlu0 %465
        %v468 = vmul.f32 %v466, %v333
        %v469 = vmul.f32 %v466, %v339
        %v470 = vadd.f32 %v462, %v468
        %v471 = vadd.f32 %v463, %v469
        %472 = vrot.lane.b32.xlu0 %v333, 127
        %v473 = vpop.permute.xlu0 %472
        %474 = vrot.lane.b32.xlu0 %v339, 127
        %v475 = vpop.permute.xlu0 %474
        %vm476 = vcmp.lt.s32.totalorder %v347, 127
        %v477 = vsel %vm476, %v473, %v475
        %v478 = vsel %vm476, %v475, %v473
        %s479 = scalar_lea.vmem [#allocation5], 5
        %v480 = vld [vmem:[%s479] ss:$8 sm:$0x3]
        %v482 = vlaneseq
        %v483 = vshrl.u32 %v482, 7
        %v484 = vsub.s32 0, %v483
        %v485 = vrot.slane %v480, %v484
        %v486 = vlaneseq
        %v487 = vshrl.u32 %v486, 7
        %v488 = vsub.s32 1, %v487
        %v489 = vrot.slane %v480, %v488
        %v492 = vmul.f32 %v477, %v485
        %v493 = vmul.f32 %v478, %v489
        %494 = vset.pattern.permute.xlu0 5
        %495 = vperm.xlu0 %494, %v340
        %v496 = vpop.permute.xlu0 %495
        %v498 = vmul.f32 %v496, %v492
        %v499 = vmul.f32 %v496, %v493
        %v500 = vadd.f32 %v470, %v498
        %v501 = vadd.f32 %v471, %v499
        %502 = vrot.lane.b32.xlu0 %v333, 113
        %v503 = vpop.permute.xlu0 %502
        %504 = vrot.lane.b32.xlu0 %v339, 113
        %v505 = vpop.permute.xlu0 %504
        %vm506 = vcmp.lt.s32.totalorder %v347, 113
        %v507 = vsel %vm506, %v503, %v505
        %v508 = vsel %vm506, %v505, %v503
        %s509 = scalar_lea.vmem [#allocation5], 6
        %v510 = vld [vmem:[%s509] ss:$8 sm:$0x3]
        %v512 = vlaneseq
        %v513 = vshrl.u32 %v512, 7
        %v514 = vsub.s32 0, %v513
        %v515 = vrot.slane %v510, %v514
        %v516 = vlaneseq
        %v517 = vshrl.u32 %v516, 7
        %v518 = vsub.s32 1, %v517
        %v519 = vrot.slane %v510, %v518
        %v522 = vmul.f32 %v507, %v515
        %v523 = vmul.f32 %v508, %v519
        %524 = vset.pattern.permute.xlu0 6
        %525 = vperm.xlu0 %524, %v340
        %v526 = vpop.permute.xlu0 %525
        %v528 = vmul.f32 %v526, %v522
        %v529 = vmul.f32 %v526, %v523
        %v530 = vadd.f32 %v500, %v528
        %v531 = vadd.f32 %v501, %v529
        %532 = vrot.lane.b32.xlu0 %v333, 112
        %v533 = vpop.permute.xlu0 %532
        %534 = vrot.lane.b32.xlu0 %v339, 112
        %v535 = vpop.permute.xlu0 %534
        %vm536 = vcmp.lt.s32.totalorder %v347, 112
        %v537 = vsel %vm536, %v533, %v535
        %v538 = vsel %vm536, %v535, %v533
        %s539 = scalar_lea.vmem [#allocation5], 7
        %v540 = vld [vmem:[%s539] ss:$8 sm:$0x3]
        %v542 = vlaneseq
        %v543 = vshrl.u32 %v542, 7
        %v544 = vsub.s32 0, %v543
        %v545 = vrot.slane %v540, %v544
        %v546 = vlaneseq
        %v547 = vshrl.u32 %v546, 7
        %v548 = vsub.s32 1, %v547
        %v549 = vrot.slane %v540, %v548
        %v552 = vmul.f32 %v537, %v545
        %v553 = vmul.f32 %v538, %v549
        %554 = vset.pattern.permute.xlu0 7
        %555 = vperm.xlu0 %554, %v340
        %v556 = vpop.permute.xlu0 %555
        %v558 = vmul.f32 %v556, %v552
        %v559 = vmul.f32 %v556, %v553
        %v560 = vadd.f32 %v530, %v558
        %v561 = vadd.f32 %v531, %v559
        %562 = vrot.lane.b32.xlu0 %v333, 111
        %v563 = vpop.permute.xlu0 %562
        %564 = vrot.lane.b32.xlu0 %v339, 111
        %v565 = vpop.permute.xlu0 %564
        %vm566 = vcmp.lt.s32.totalorder %v347, 111
        %v567 = vsel %vm566, %v563, %v565
        %v568 = vsel %vm566, %v565, %v563
        %s569 = scalar_lea.vmem [#allocation5], 16
        %v570 = vld [vmem:[%s569] ss:$8 sm:$0x3]
        %v572 = vlaneseq
        %v573 = vshrl.u32 %v572, 7
        %v574 = vsub.s32 0, %v573
        %v575 = vrot.slane %v570, %v574
        %v576 = vlaneseq
        %v577 = vshrl.u32 %v576, 7
        %v578 = vsub.s32 1, %v577
        %v579 = vrot.slane %v570, %v578
        %v582 = vmul.f32 %v567, %v575
        %v583 = vmul.f32 %v568, %v579
        %584 = vset.pattern.permute.xlu0 8
        %585 = vperm.xlu0 %584, %v340
        %v586 = vpop.permute.xlu0 %585
        %v588 = vmul.f32 %v586, %v582
        %v589 = vmul.f32 %v586, %v583
        %v590 = vadd.f32 %v560, %v588
        %v591 = vadd.f32 %v561, %v589
        %v592 = vld [vmem:[%s4] sm:$0xff]
        %594 = vset.pattern.permute.xlu0 0
        %595 = vperm.xlu0 %594, %v592
        %v596 = vpop.permute.xlu0 %595
        %v598 = vadd.f32 %v590, %v596
        %v599 = vadd.f32 %v591, %v596
        %v600 = vmax.f32 %v598, 0.0
        %v601 = vmax.f32 %v599, 0.0
        %602 = vrot.lane.b32.xlu0 %v600, 17
        %v603 = vpop.permute.xlu0 %602
        %604 = vrot.lane.b32.xlu0 %v601, 17
        %v605 = vpop.permute.xlu0 %604
        %v606 = vsel %vm348, %v603, %v605
        %v607 = vsel %vm348, %v605, %v603
        %v608 = vmul.f32 %v607, %v356
        %v609 = vmul.f32 %v606, %v360
        %611 = vset.pattern.permute.xlu0 0
        %612 = vperm.xlu0 %611, %v341
        %v613 = vpop.permute.xlu0 %612
        %v615 = vlaneseq
        %v616 = vshrl.u32 %v615, 7
        %v617 = vsub.s32 0, %v616
        %v618 = vrot.slane %v608, %v617
        %v619 = vlaneseq
        %v620 = vshrl.u32 %v619, 7
        %v621 = vsub.s32 0, %v620
        %v622 = vrot.slane %v609, %v621
        %v623 = vmul.f32 %v613, %v618
        %v624 = vmul.f32 %v613, %v622
        %v625 = vadd.f32 %v623, 0.0
        %v626 = vadd.f32 %v624, 0.0
        %627 = vset.pattern.permute.xlu0 1
        %628 = vperm.xlu0 %627, %v341
        %v629 = vpop.permute.xlu0 %628
        %v631 = vlaneseq
        %v632 = vshrl.u32 %v631, 7
        %v633 = vsub.s32 1, %v632
        %v634 = vrot.slane %v608, %v633
        %v635 = vlaneseq
        %v636 = vshrl.u32 %v635, 7
        %v637 = vsub.s32 1, %v636
        %v638 = vrot.slane %v609, %v637
        %v639 = vmul.f32 %v629, %v634
        %v640 = vmul.f32 %v629, %v638
        %v641 = vadd.f32 %v625, %v639
        %v642 = vadd.f32 %v626, %v640
        %643 = vset.pattern.permute.xlu0 2
        %644 = vperm.xlu0 %643, %v341
        %v645 = vpop.permute.xlu0 %644
        %v647 = vlaneseq
        %v648 = vshrl.u32 %v647, 7
        %v649 = vsub.s32 2, %v648
        %v650 = vrot.slane %v608, %v649
        %v651 = vlaneseq
        %v652 = vshrl.u32 %v651, 7
        %v653 = vsub.s32 2, %v652
        %v654 = vrot.slane %v609, %v653
        %v655 = vmul.f32 %v645, %v650
        %v656 = vmul.f32 %v645, %v654
        %v657 = vadd.f32 %v641, %v655
        %v658 = vadd.f32 %v642, %v656
        %659 = vset.pattern.permute.xlu0 3
        %660 = vperm.xlu0 %659, %v341
        %v661 = vpop.permute.xlu0 %660
        %v663 = vlaneseq
        %v664 = vshrl.u32 %v663, 7
        %v665 = vsub.s32 3, %v664
        %v666 = vrot.slane %v608, %v665
        %v667 = vlaneseq
        %v668 = vshrl.u32 %v667, 7
        %v669 = vsub.s32 3, %v668
        %v670 = vrot.slane %v609, %v669
        %v671 = vmul.f32 %v661, %v666
        %v672 = vmul.f32 %v661, %v670
        %v673 = vadd.f32 %v657, %v671
        %v674 = vadd.f32 %v658, %v672
        %675 = vset.pattern.permute.xlu0 4
        %676 = vperm.xlu0 %675, %v341
        %v677 = vpop.permute.xlu0 %676
        %v679 = vlaneseq
        %v680 = vshrl.u32 %v679, 7
        %v681 = vsub.s32 4, %v680
        %v682 = vrot.slane %v608, %v681
        %v683 = vlaneseq
        %v684 = vshrl.u32 %v683, 7
        %v685 = vsub.s32 4, %v684
        %v686 = vrot.slane %v609, %v685
        %v687 = vmul.f32 %v677, %v682
        %v688 = vmul.f32 %v677, %v686
        %v689 = vadd.f32 %v673, %v687
        %v690 = vadd.f32 %v674, %v688
        %691 = vset.pattern.permute.xlu0 5
        %692 = vperm.xlu0 %691, %v341
        %v693 = vpop.permute.xlu0 %692
        %v695 = vlaneseq
        %v696 = vshrl.u32 %v695, 7
        %v697 = vsub.s32 5, %v696
        %v698 = vrot.slane %v608, %v697
        %v699 = vlaneseq
        %v700 = vshrl.u32 %v699, 7
        %v701 = vsub.s32 5, %v700
        %v702 = vrot.slane %v609, %v701
        %v703 = vmul.f32 %v693, %v698
        %v704 = vmul.f32 %v693, %v702
        %v705 = vadd.f32 %v689, %v703
        %v706 = vadd.f32 %v690, %v704
        %707 = vset.pattern.permute.xlu0 6
        %708 = vperm.xlu0 %707, %v341
        %v709 = vpop.permute.xlu0 %708
        %v711 = vlaneseq
        %v712 = vshrl.u32 %v711, 7
        %v713 = vsub.s32 6, %v712
        %v714 = vrot.slane %v608, %v713
        %v715 = vlaneseq
        %v716 = vshrl.u32 %v715, 7
        %v717 = vsub.s32 6, %v716
        %v718 = vrot.slane %v609, %v717
        %v719 = vmul.f32 %v709, %v714
        %v720 = vmul.f32 %v709, %v718
        %v721 = vadd.f32 %v705, %v719
        %v722 = vadd.f32 %v706, %v720
        %723 = vset.pattern.permute.xlu0 7
        %724 = vperm.xlu0 %723, %v341
        %v725 = vpop.permute.xlu0 %724
        %v727 = vlaneseq
        %v728 = vshrl.u32 %v727, 7
        %v729 = vsub.s32 7, %v728
        %v730 = vrot.slane %v608, %v729
        %v731 = vlaneseq
        %v732 = vshrl.u32 %v731, 7
        %v733 = vsub.s32 7, %v732
        %v734 = vrot.slane %v609, %v733
        %v735 = vmul.f32 %v725, %v730
        %v736 = vmul.f32 %v725, %v734
        %v737 = vadd.f32 %v721, %v735
        %v738 = vadd.f32 %v722, %v736
        %739 = vrot.lane.b32.xlu0 %v600, 16
        %v740 = vpop.permute.xlu0 %739
        %741 = vrot.lane.b32.xlu0 %v601, 16
        %v742 = vpop.permute.xlu0 %741
        %v743 = vsel %vm378, %v740, %v742
        %v744 = vsel %vm378, %v742, %v740
        %v745 = vmul.f32 %v744, %v387
        %v746 = vmul.f32 %v743, %v391
        %747 = vset.pattern.permute.xlu0 8
        %748 = vperm.xlu0 %747, %v341
        %v749 = vpop.permute.xlu0 %748
        %v751 = vlaneseq
        %v752 = vshrl.u32 %v751, 7
        %v753 = vsub.s32 0, %v752
        %v754 = vrot.slane %v745, %v753
        %v755 = vlaneseq
        %v756 = vshrl.u32 %v755, 7
        %v757 = vsub.s32 0, %v756
        %v758 = vrot.slane %v746, %v757
        %v759 = vmul.f32 %v749, %v754
        %v760 = vmul.f32 %v749, %v758
        %v761 = vadd.f32 %v737, %v759
        %v762 = vadd.f32 %v738, %v760
        %763 = vset.pattern.permute.xlu0 9
        %764 = vperm.xlu0 %763, %v341
        %v765 = vpop.permute.xlu0 %764
        %v767 = vlaneseq
        %v768 = vshrl.u32 %v767, 7
        %v769 = vsub.s32 1, %v768
        %v770 = vrot.slane %v745, %v769
        %v771 = vlaneseq
        %v772 = vshrl.u32 %v771, 7
        %v773 = vsub.s32 1, %v772
        %v774 = vrot.slane %v746, %v773
        %v775 = vmul.f32 %v765, %v770
        %v776 = vmul.f32 %v765, %v774
        %v777 = vadd.f32 %v761, %v775
        %v778 = vadd.f32 %v762, %v776
        %779 = vset.pattern.permute.xlu0 10
        %780 = vperm.xlu0 %779, %v341
        %v781 = vpop.permute.xlu0 %780
        %v783 = vlaneseq
        %v784 = vshrl.u32 %v783, 7
        %v785 = vsub.s32 2, %v784
        %v786 = vrot.slane %v745, %v785
        %v787 = vlaneseq
        %v788 = vshrl.u32 %v787, 7
        %v789 = vsub.s32 2, %v788
        %v790 = vrot.slane %v746, %v789
        %v791 = vmul.f32 %v781, %v786
        %v792 = vmul.f32 %v781, %v790
        %v793 = vadd.f32 %v777, %v791
        %v794 = vadd.f32 %v778, %v792
        %795 = vset.pattern.permute.xlu0 11
        %796 = vperm.xlu0 %795, %v341
        %v797 = vpop.permute.xlu0 %796
        %v799 = vlaneseq
        %v800 = vshrl.u32 %v799, 7
        %v801 = vsub.s32 3, %v800
        %v802 = vrot.slane %v745, %v801
        %v803 = vlaneseq
        %v804 = vshrl.u32 %v803, 7
        %v805 = vsub.s32 3, %v804
        %v806 = vrot.slane %v746, %v805
        %v807 = vmul.f32 %v797, %v802
        %v808 = vmul.f32 %v797, %v806
        %v809 = vadd.f32 %v793, %v807
        %v810 = vadd.f32 %v794, %v808
        %811 = vset.pattern.permute.xlu0 12
        %812 = vperm.xlu0 %811, %v341
        %v813 = vpop.permute.xlu0 %812
        %v815 = vlaneseq
        %v816 = vshrl.u32 %v815, 7
        %v817 = vsub.s32 4, %v816
        %v818 = vrot.slane %v745, %v817
        %v819 = vlaneseq
        %v820 = vshrl.u32 %v819, 7
        %v821 = vsub.s32 4, %v820
        %v822 = vrot.slane %v746, %v821
        %v823 = vmul.f32 %v813, %v818
        %v824 = vmul.f32 %v813, %v822
        %v825 = vadd.f32 %v809, %v823
        %v826 = vadd.f32 %v810, %v824
        %827 = vset.pattern.permute.xlu0 13
        %828 = vperm.xlu0 %827, %v341
        %v829 = vpop.permute.xlu0 %828
        %v831 = vlaneseq
        %v832 = vshrl.u32 %v831, 7
        %v833 = vsub.s32 5, %v832
        %v834 = vrot.slane %v745, %v833
        %v835 = vlaneseq
        %v836 = vshrl.u32 %v835, 7
        %v837 = vsub.s32 5, %v836
        %v838 = vrot.slane %v746, %v837
        %v839 = vmul.f32 %v829, %v834
        %v840 = vmul.f32 %v829, %v838
        %v841 = vadd.f32 %v825, %v839
        %v842 = vadd.f32 %v826, %v840
        %843 = vset.pattern.permute.xlu0 14
        %844 = vperm.xlu0 %843, %v341
        %v845 = vpop.permute.xlu0 %844
        %v847 = vlaneseq
        %v848 = vshrl.u32 %v847, 7
        %v849 = vsub.s32 6, %v848
        %v850 = vrot.slane %v745, %v849
        %v851 = vlaneseq
        %v852 = vshrl.u32 %v851, 7
        %v853 = vsub.s32 6, %v852
        %v854 = vrot.slane %v746, %v853
        %v855 = vmul.f32 %v845, %v850
        %v856 = vmul.f32 %v845, %v854
        %v857 = vadd.f32 %v841, %v855
        %v858 = vadd.f32 %v842, %v856
        %859 = vset.pattern.permute.xlu0 15
        %860 = vperm.xlu0 %859, %v341
        %v861 = vpop.permute.xlu0 %860
        %v863 = vlaneseq
        %v864 = vshrl.u32 %v863, 7
        %v865 = vsub.s32 7, %v864
        %v866 = vrot.slane %v745, %v865
        %v867 = vlaneseq
        %v868 = vshrl.u32 %v867, 7
        %v869 = vsub.s32 7, %v868
        %v870 = vrot.slane %v746, %v869
        %v871 = vmul.f32 %v861, %v866
        %v872 = vmul.f32 %v861, %v870
        %v873 = vadd.f32 %v857, %v871
        %v874 = vadd.f32 %v858, %v872
        %875 = vrot.lane.b32.xlu0 %v600, 15
        %v876 = vpop.permute.xlu0 %875
        %877 = vrot.lane.b32.xlu0 %v601, 15
        %v878 = vpop.permute.xlu0 %877
        %v879 = vsel %vm408, %v876, %v878
        %v880 = vsel %vm408, %v878, %v876
        %v881 = vmul.f32 %v880, %v417
        %v882 = vmul.f32 %v879, %v421
        %883 = vset.pattern.permute.xlu0 16
        %884 = vperm.xlu0 %883, %v341
        %v885 = vpop.permute.xlu0 %884
        %v887 = vlaneseq
        %v888 = vshrl.u32 %v887, 7
        %v889 = vsub.s32 0, %v888
        %v890 = vrot.slane %v881, %v889
        %v891 = vlaneseq
        %v892 = vshrl.u32 %v891, 7
        %v893 = vsub.s32 0, %v892
        %v894 = vrot.slane %v882, %v893
        %v895 = vmul.f32 %v885, %v890
        %v896 = vmul.f32 %v885, %v894
        %v897 = vadd.f32 %v873, %v895
        %v898 = vadd.f32 %v874, %v896
        %899 = vset.pattern.permute.xlu0 17
        %900 = vperm.xlu0 %899, %v341
        %v901 = vpop.permute.xlu0 %900
        %v903 = vlaneseq
        %v904 = vshrl.u32 %v903, 7
        %v905 = vsub.s32 1, %v904
        %v906 = vrot.slane %v881, %v905
        %v907 = vlaneseq
        %v908 = vshrl.u32 %v907, 7
        %v909 = vsub.s32 1, %v908
        %v910 = vrot.slane %v882, %v909
        %v911 = vmul.f32 %v901, %v906
        %v912 = vmul.f32 %v901, %v910
        %v913 = vadd.f32 %v897, %v911
        %v914 = vadd.f32 %v898, %v912
        %915 = vset.pattern.permute.xlu0 18
        %916 = vperm.xlu0 %915, %v341
        %v917 = vpop.permute.xlu0 %916
        %v919 = vlaneseq
        %v920 = vshrl.u32 %v919, 7
        %v921 = vsub.s32 2, %v920
        %v922 = vrot.slane %v881, %v921
        %v923 = vlaneseq
        %v924 = vshrl.u32 %v923, 7
        %v925 = vsub.s32 2, %v924
        %v926 = vrot.slane %v882, %v925
        %v927 = vmul.f32 %v917, %v922
        %v928 = vmul.f32 %v917, %v926
        %v929 = vadd.f32 %v913, %v927
        %v930 = vadd.f32 %v914, %v928
        %931 = vset.pattern.permute.xlu0 19
        %932 = vperm.xlu0 %931, %v341
        %v933 = vpop.permute.xlu0 %932
        %v935 = vlaneseq
        %v936 = vshrl.u32 %v935, 7
        %v937 = vsub.s32 3, %v936
        %v938 = vrot.slane %v881, %v937
        %v939 = vlaneseq
        %v940 = vshrl.u32 %v939, 7
        %v941 = vsub.s32 3, %v940
        %v942 = vrot.slane %v882, %v941
        %v943 = vmul.f32 %v933, %v938
        %v944 = vmul.f32 %v933, %v942
        %v945 = vadd.f32 %v929, %v943
        %v946 = vadd.f32 %v930, %v944
        %947 = vset.pattern.permute.xlu0 20
        %948 = vperm.xlu0 %947, %v341
        %v949 = vpop.permute.xlu0 %948
        %v951 = vlaneseq
        %v952 = vshrl.u32 %v951, 7
        %v953 = vsub.s32 4, %v952
        %v954 = vrot.slane %v881, %v953
        %v955 = vlaneseq
        %v956 = vshrl.u32 %v955, 7
        %v957 = vsub.s32 4, %v956
        %v958 = vrot.slane %v882, %v957
        %v959 = vmul.f32 %v949, %v954
        %v960 = vmul.f32 %v949, %v958
        %v961 = vadd.f32 %v945, %v959
        %v962 = vadd.f32 %v946, %v960
        %963 = vset.pattern.permute.xlu0 21
        %964 = vperm.xlu0 %963, %v341
        %v965 = vpop.permute.xlu0 %964
        %v967 = vlaneseq
        %v968 = vshrl.u32 %v967, 7
        %v969 = vsub.s32 5, %v968
        %v970 = vrot.slane %v881, %v969
        %v971 = vlaneseq
        %v972 = vshrl.u32 %v971, 7
        %v973 = vsub.s32 5, %v972
        %v974 = vrot.slane %v882, %v973
        %v975 = vmul.f32 %v965, %v970
        %v976 = vmul.f32 %v965, %v974
        %v977 = vadd.f32 %v961, %v975
        %v978 = vadd.f32 %v962, %v976
        %979 = vset.pattern.permute.xlu0 22
        %980 = vperm.xlu0 %979, %v341
        %v981 = vpop.permute.xlu0 %980
        %v983 = vlaneseq
        %v984 = vshrl.u32 %v983, 7
        %v985 = vsub.s32 6, %v984
        %v986 = vrot.slane %v881, %v985
        %v987 = vlaneseq
        %v988 = vshrl.u32 %v987, 7
        %v989 = vsub.s32 6, %v988
        %v990 = vrot.slane %v882, %v989
        %v991 = vmul.f32 %v981, %v986
        %v992 = vmul.f32 %v981, %v990
        %v993 = vadd.f32 %v977, %v991
        %v994 = vadd.f32 %v978, %v992
        %995 = vset.pattern.permute.xlu0 23
        %996 = vperm.xlu0 %995, %v341
        %v997 = vpop.permute.xlu0 %996
        %v999 = vlaneseq
        %v1000 = vshrl.u32 %v999, 7
        %v1001 = vsub.s32 7, %v1000
        %v1002 = vrot.slane %v881, %v1001
        %v1003 = vlaneseq
        %v1004 = vshrl.u32 %v1003, 7
        %v1005 = vsub.s32 7, %v1004
        %v1006 = vrot.slane %v882, %v1005
        %v1007 = vmul.f32 %v997, %v1002
        %v1008 = vmul.f32 %v997, %v1006
        %v1009 = vadd.f32 %v993, %v1007
        %v1010 = vadd.f32 %v994, %v1008
        %1011 = vrot.lane.b32.xlu0 %v600, 1
        %v1012 = vpop.permute.xlu0 %1011
        %1013 = vrot.lane.b32.xlu0 %v601, 1
        %v1014 = vpop.permute.xlu0 %1013
        %v1015 = vsel %vm438, %v1012, %v1014
        %v1016 = vsel %vm438, %v1014, %v1012
        %v1017 = vmul.f32 %v1016, %v447
        %v1018 = vmul.f32 %v1015, %v451
        %1019 = vset.pattern.permute.xlu0 24
        %1020 = vperm.xlu0 %1019, %v341
        %v1021 = vpop.permute.xlu0 %1020
        %v1023 = vlaneseq
        %v1024 = vshrl.u32 %v1023, 7
        %v1025 = vsub.s32 0, %v1024
        %v1026 = vrot.slane %v1017, %v1025
        %v1027 = vlaneseq
        %v1028 = vshrl.u32 %v1027, 7
        %v1029 = vsub.s32 0, %v1028
        %v1030 = vrot.slane %v1018, %v1029
        %v1031 = vmul.f32 %v1021, %v1026
        %v1032 = vmul.f32 %v1021, %v1030
        %v1033 = vadd.f32 %v1009, %v1031
        %v1034 = vadd.f32 %v1010, %v1032
        %1035 = vset.pattern.permute.xlu0 25
        %1036 = vperm.xlu0 %1035, %v341
        %v1037 = vpop.permute.xlu0 %1036
        %v1039 = vlaneseq
        %v1040 = vshrl.u32 %v1039, 7
        %v1041 = vsub.s32 1, %v1040
        %v1042 = vrot.slane %v1017, %v1041
        %v1043 = vlaneseq
        %v1044 = vshrl.u32 %v1043, 7
        %v1045 = vsub.s32 1, %v1044
        %v1046 = vrot.slane %v1018, %v1045
        %v1047 = vmul.f32 %v1037, %v1042
        %v1048 = vmul.f32 %v1037, %v1046
        %v1049 = vadd.f32 %v1033, %v1047
        %v1050 = vadd.f32 %v1034, %v1048
        %1051 = vset.pattern.permute.xlu0 26
        %1052 = vperm.xlu0 %1051, %v341
        %v1053 = vpop.permute.xlu0 %1052
        %v1055 = vlaneseq
        %v1056 = vshrl.u32 %v1055, 7
        %v1057 = vsub.s32 2, %v1056
        %v1058 = vrot.slane %v1017, %v1057
        %v1059 = vlaneseq
        %v1060 = vshrl.u32 %v1059, 7
        %v1061 = vsub.s32 2, %v1060
        %v1062 = vrot.slane %v1018, %v1061
        %v1063 = vmul.f32 %v1053, %v1058
        %v1064 = vmul.f32 %v1053, %v1062
        %v1065 = vadd.f32 %v1049, %v1063
        %v1066 = vadd.f32 %v1050, %v1064
        %1067 = vset.pattern.permute.xlu0 27
        %1068 = vperm.xlu0 %1067, %v341
        %v1069 = vpop.permute.xlu0 %1068
        %v1071 = vlaneseq
        %v1072 = vshrl.u32 %v1071, 7
        %v1073 = vsub.s32 3, %v1072
        %v1074 = vrot.slane %v1017, %v1073
        %v1075 = vlaneseq
        %v1076 = vshrl.u32 %v1075, 7
        %v1077 = vsub.s32 3, %v1076
        %v1078 = vrot.slane %v1018, %v1077
        %v1079 = vmul.f32 %v1069, %v1074
        %v1080 = vmul.f32 %v1069, %v1078
        %v1081 = vadd.f32 %v1065, %v1079
        %v1082 = vadd.f32 %v1066, %v1080
        %1083 = vset.pattern.permute.xlu0 28
        %1084 = vperm.xlu0 %1083, %v341
        %v1085 = vpop.permute.xlu0 %1084
        %v1087 = vlaneseq
        %v1088 = vshrl.u32 %v1087, 7
        %v1089 = vsub.s32 4, %v1088
        %v1090 = vrot.slane %v1017, %v1089
        %v1091 = vlaneseq
        %v1092 = vshrl.u32 %v1091, 7
        %v1093 = vsub.s32 4, %v1092
        %v1094 = vrot.slane %v1018, %v1093
        %v1095 = vmul.f32 %v1085, %v1090
        %v1096 = vmul.f32 %v1085, %v1094
        %v1097 = vadd.f32 %v1081, %v1095
        %v1098 = vadd.f32 %v1082, %v1096
        %1099 = vset.pattern.permute.xlu0 29
        %1100 = vperm.xlu0 %1099, %v341
        %v1101 = vpop.permute.xlu0 %1100
        %v1103 = vlaneseq
        %v1104 = vshrl.u32 %v1103, 7
        %v1105 = vsub.s32 5, %v1104
        %v1106 = vrot.slane %v1017, %v1105
        %v1107 = vlaneseq
        %v1108 = vshrl.u32 %v1107, 7
        %v1109 = vsub.s32 5, %v1108
        %v1110 = vrot.slane %v1018, %v1109
        %v1111 = vmul.f32 %v1101, %v1106
        %v1112 = vmul.f32 %v1101, %v1110
        %v1113 = vadd.f32 %v1097, %v1111
        %v1114 = vadd.f32 %v1098, %v1112
        %1115 = vset.pattern.permute.xlu0 30
        %1116 = vperm.xlu0 %1115, %v341
        %v1117 = vpop.permute.xlu0 %1116
        %v1119 = vlaneseq
        %v1120 = vshrl.u32 %v1119, 7
        %v1121 = vsub.s32 6, %v1120
        %v1122 = vrot.slane %v1017, %v1121
        %v1123 = vlaneseq
        %v1124 = vshrl.u32 %v1123, 7
        %v1125 = vsub.s32 6, %v1124
        %v1126 = vrot.slane %v1018, %v1125
        %v1127 = vmul.f32 %v1117, %v1122
        %v1128 = vmul.f32 %v1117, %v1126
        %v1129 = vadd.f32 %v1113, %v1127
        %v1130 = vadd.f32 %v1114, %v1128
        %1131 = vset.pattern.permute.xlu0 31
        %1132 = vperm.xlu0 %1131, %v341
        %v1133 = vpop.permute.xlu0 %1132
        %v1135 = vlaneseq
        %v1136 = vshrl.u32 %v1135, 7
        %v1137 = vsub.s32 7, %v1136
        %v1138 = vrot.slane %v1017, %v1137
        %v1139 = vlaneseq
        %v1140 = vshrl.u32 %v1139, 7
        %v1141 = vsub.s32 7, %v1140
        %v1142 = vrot.slane %v1018, %v1141
        %v1143 = vmul.f32 %v1133, %v1138
        %v1144 = vmul.f32 %v1133, %v1142
        %v1145 = vadd.f32 %v1129, %v1143
        %v1146 = vadd.f32 %v1130, %v1144
        %1147 = vset.pattern.permute.xlu0 32
        %1148 = vperm.xlu0 %1147, %v341
        %v1149 = vpop.permute.xlu0 %1148
        %v1151 = vlaneseq
        %v1152 = vshrl.u32 %v1151, 7
        %v1153 = vsub.s32 0, %v1152
        %v1154 = vrot.slane %v600, %v1153
        %v1155 = vlaneseq
        %v1156 = vshrl.u32 %v1155, 7
        %v1157 = vsub.s32 0, %v1156
        %v1158 = vrot.slane %v601, %v1157
        %v1159 = vmul.f32 %v1149, %v1154
        %v1160 = vmul.f32 %v1149, %v1158
        %v1161 = vadd.f32 %v1145, %v1159
        %v1162 = vadd.f32 %v1146, %v1160
        %1163 = vset.pattern.permute.xlu0 33
        %1164 = vperm.xlu0 %1163, %v341
        %v1165 = vpop.permute.xlu0 %1164
        %v1167 = vlaneseq
        %v1168 = vshrl.u32 %v1167, 7
        %v1169 = vsub.s32 1, %v1168
        %v1170 = vrot.slane %v600, %v1169
        %v1171 = vlaneseq
        %v1172 = vshrl.u32 %v1171, 7
        %v1173 = vsub.s32 1, %v1172
        %v1174 = vrot.slane %v601, %v1173
        %v1175 = vmul.f32 %v1165, %v1170
        %v1176 = vmul.f32 %v1165, %v1174
        %v1177 = vadd.f32 %v1161, %v1175
        %v1178 = vadd.f32 %v1162, %v1176
        %1179 = vset.pattern.permute.xlu0 34
        %1180 = vperm.xlu0 %1179, %v341
        %v1181 = vpop.permute.xlu0 %1180
        %v1183 = vlaneseq
        %v1184 = vshrl.u32 %v1183, 7
        %v1185 = vsub.s32 2, %v1184
        %v1186 = vrot.slane %v600, %v1185
        %v1187 = vlaneseq
        %v1188 = vshrl.u32 %v1187, 7
        %v1189 = vsub.s32 2, %v1188
        %v1190 = vrot.slane %v601, %v1189
        %v1191 = vmul.f32 %v1181, %v1186
        %v1192 = vmul.f32 %v1181, %v1190
        %v1193 = vadd.f32 %v1177, %v1191
        %v1194 = vadd.f32 %v1178, %v1192
        %1195 = vset.pattern.permute.xlu0 35
        %1196 = vperm.xlu0 %1195, %v341
        %v1197 = vpop.permute.xlu0 %1196
        %v1199 = vlaneseq
        %v1200 = vshrl.u32 %v1199, 7
        %v1201 = vsub.s32 3, %v1200
        %v1202 = vrot.slane %v600, %v1201
        %v1203 = vlaneseq
        %v1204 = vshrl.u32 %v1203, 7
        %v1205 = vsub.s32 3, %v1204
        %v1206 = vrot.slane %v601, %v1205
        %v1207 = vmul.f32 %v1197, %v1202
        %v1208 = vmul.f32 %v1197, %v1206
        %v1209 = vadd.f32 %v1193, %v1207
        %v1210 = vadd.f32 %v1194, %v1208
        %1211 = vset.pattern.permute.xlu0 36
        %1212 = vperm.xlu0 %1211, %v341
        %v1213 = vpop.permute.xlu0 %1212
        %v1215 = vlaneseq
        %v1216 = vshrl.u32 %v1215, 7
        %v1217 = vsub.s32 4, %v1216
        %v1218 = vrot.slane %v600, %v1217
        %v1219 = vlaneseq
        %v1220 = vshrl.u32 %v1219, 7
        %v1221 = vsub.s32 4, %v1220
        %v1222 = vrot.slane %v601, %v1221
        %v1223 = vmul.f32 %v1213, %v1218
        %v1224 = vmul.f32 %v1213, %v1222
        %v1225 = vadd.f32 %v1209, %v1223
        %v1226 = vadd.f32 %v1210, %v1224
        %1227 = vset.pattern.permute.xlu0 37
        %1228 = vperm.xlu0 %1227, %v341
        %v1229 = vpop.permute.xlu0 %1228
        %v1231 = vlaneseq
        %v1232 = vshrl.u32 %v1231, 7
        %v1233 = vsub.s32 5, %v1232
        %v1234 = vrot.slane %v600, %v1233
        %v1235 = vlaneseq
        %v1236 = vshrl.u32 %v1235, 7
        %v1237 = vsub.s32 5, %v1236
        %v1238 = vrot.slane %v601, %v1237
        %v1239 = vmul.f32 %v1229, %v1234
        %v1240 = vmul.f32 %v1229, %v1238
        %v1241 = vadd.f32 %v1225, %v1239
        %v1242 = vadd.f32 %v1226, %v1240
        %1243 = vset.pattern.permute.xlu0 38
        %1244 = vperm.xlu0 %1243, %v341
        %v1245 = vpop.permute.xlu0 %1244
        %v1247 = vlaneseq
        %v1248 = vshrl.u32 %v1247, 7
        %v1249 = vsub.s32 6, %v1248
        %v1250 = vrot.slane %v600, %v1249
        %v1251 = vlaneseq
        %v1252 = vshrl.u32 %v1251, 7
        %v1253 = vsub.s32 6, %v1252
        %v1254 = vrot.slane %v601, %v1253
        %v1255 = vmul.f32 %v1245, %v1250
        %v1256 = vmul.f32 %v1245, %v1254
        %v1257 = vadd.f32 %v1241, %v1255
        %v1258 = vadd.f32 %v1242, %v1256
        %1259 = vset.pattern.permute.xlu0 39
        %1260 = vperm.xlu0 %1259, %v341
        %v1261 = vpop.permute.xlu0 %1260
        %v1263 = vlaneseq
        %v1264 = vshrl.u32 %v1263, 7
        %v1265 = vsub.s32 7, %v1264
        %v1266 = vrot.slane %v600, %v1265
        %v1267 = vlaneseq
        %v1268 = vshrl.u32 %v1267, 7
        %v1269 = vsub.s32 7, %v1268
        %v1270 = vrot.slane %v601, %v1269
        %v1271 = vmul.f32 %v1261, %v1266
        %v1272 = vmul.f32 %v1261, %v1270
        %v1273 = vadd.f32 %v1257, %v1271
        %v1274 = vadd.f32 %v1258, %v1272
        %1275 = vrot.lane.b32.xlu0 %v600, 127
        %v1276 = vpop.permute.xlu0 %1275
        %1277 = vrot.lane.b32.xlu0 %v601, 127
        %v1278 = vpop.permute.xlu0 %1277
        %v1279 = vsel %vm476, %v1276, %v1278
        %v1280 = vsel %vm476, %v1278, %v1276
        %v1281 = vmul.f32 %v1279, %v485
        %v1282 = vmul.f32 %v1280, %v489
        %1283 = vset.pattern.permute.xlu0 40
        %1284 = vperm.xlu0 %1283, %v341
        %v1285 = vpop.permute.xlu0 %1284
        %v1287 = vlaneseq
        %v1288 = vshrl.u32 %v1287, 7
        %v1289 = vsub.s32 0, %v1288
        %v1290 = vrot.slane %v1281, %v1289
        %v1291 = vlaneseq
        %v1292 = vshrl.u32 %v1291, 7
        %v1293 = vsub.s32 0, %v1292
        %v1294 = vrot.slane %v1282, %v1293
        %v1295 = vmul.f32 %v1285, %v1290
        %v1296 = vmul.f32 %v1285, %v1294
        %v1297 = vadd.f32 %v1273, %v1295
        %v1298 = vadd.f32 %v1274, %v1296
        %1299 = vset.pattern.permute.xlu0 41
        %1300 = vperm.xlu0 %1299, %v341
        %v1301 = vpop.permute.xlu0 %1300
        %v1303 = vlaneseq
        %v1304 = vshrl.u32 %v1303, 7
        %v1305 = vsub.s32 1, %v1304
        %v1306 = vrot.slane %v1281, %v1305
        %v1307 = vlaneseq
        %v1308 = vshrl.u32 %v1307, 7
        %v1309 = vsub.s32 1, %v1308
        %v1310 = vrot.slane %v1282, %v1309
        %v1311 = vmul.f32 %v1301, %v1306
        %v1312 = vmul.f32 %v1301, %v1310
        %v1313 = vadd.f32 %v1297, %v1311
        %v1314 = vadd.f32 %v1298, %v1312
        %1315 = vset.pattern.permute.xlu0 42
        %1316 = vperm.xlu0 %1315, %v341
        %v1317 = vpop.permute.xlu0 %1316
        %v1319 = vlaneseq
        %v1320 = vshrl.u32 %v1319, 7
        %v1321 = vsub.s32 2, %v1320
        %v1322 = vrot.slane %v1281, %v1321
        %v1323 = vlaneseq
        %v1324 = vshrl.u32 %v1323, 7
        %v1325 = vsub.s32 2, %v1324
        %v1326 = vrot.slane %v1282, %v1325
        %v1327 = vmul.f32 %v1317, %v1322
        %v1328 = vmul.f32 %v1317, %v1326
        %v1329 = vadd.f32 %v1313, %v1327
        %v1330 = vadd.f32 %v1314, %v1328
        %1331 = vset.pattern.permute.xlu0 43
        %1332 = vperm.xlu0 %1331, %v341
        %v1333 = vpop.permute.xlu0 %1332
        %v1335 = vlaneseq
        %v1336 = vshrl.u32 %v1335, 7
        %v1337 = vsub.s32 3, %v1336
        %v1338 = vrot.slane %v1281, %v1337
        %v1339 = vlaneseq
        %v1340 = vshrl.u32 %v1339, 7
        %v1341 = vsub.s32 3, %v1340
        %v1342 = vrot.slane %v1282, %v1341
        %v1343 = vmul.f32 %v1333, %v1338
        %v1344 = vmul.f32 %v1333, %v1342
        %v1345 = vadd.f32 %v1329, %v1343
        %v1346 = vadd.f32 %v1330, %v1344
        %1347 = vset.pattern.permute.xlu0 44
        %1348 = vperm.xlu0 %1347, %v341
        %v1349 = vpop.permute.xlu0 %1348
        %v1351 = vlaneseq
        %v1352 = vshrl.u32 %v1351, 7
        %v1353 = vsub.s32 4, %v1352
        %v1354 = vrot.slane %v1281, %v1353
        %v1355 = vlaneseq
        %v1356 = vshrl.u32 %v1355, 7
        %v1357 = vsub.s32 4, %v1356
        %v1358 = vrot.slane %v1282, %v1357
        %v1359 = vmul.f32 %v1349, %v1354
        %v1360 = vmul.f32 %v1349, %v1358
        %v1361 = vadd.f32 %v1345, %v1359
        %v1362 = vadd.f32 %v1346, %v1360
        %1363 = vset.pattern.permute.xlu0 45
        %1364 = vperm.xlu0 %1363, %v341
        %v1365 = vpop.permute.xlu0 %1364
        %v1367 = vlaneseq
        %v1368 = vshrl.u32 %v1367, 7
        %v1369 = vsub.s32 5, %v1368
        %v1370 = vrot.slane %v1281, %v1369
        %v1371 = vlaneseq
        %v1372 = vshrl.u32 %v1371, 7
        %v1373 = vsub.s32 5, %v1372
        %v1374 = vrot.slane %v1282, %v1373
        %v1375 = vmul.f32 %v1365, %v1370
        %v1376 = vmul.f32 %v1365, %v1374
        %v1377 = vadd.f32 %v1361, %v1375
        %v1378 = vadd.f32 %v1362, %v1376
        %1379 = vset.pattern.permute.xlu0 46
        %1380 = vperm.xlu0 %1379, %v341
        %v1381 = vpop.permute.xlu0 %1380
        %v1383 = vlaneseq
        %v1384 = vshrl.u32 %v1383, 7
        %v1385 = vsub.s32 6, %v1384
        %v1386 = vrot.slane %v1281, %v1385
        %v1387 = vlaneseq
        %v1388 = vshrl.u32 %v1387, 7
        %v1389 = vsub.s32 6, %v1388
        %v1390 = vrot.slane %v1282, %v1389
        %v1391 = vmul.f32 %v1381, %v1386
        %v1392 = vmul.f32 %v1381, %v1390
        %v1393 = vadd.f32 %v1377, %v1391
        %v1394 = vadd.f32 %v1378, %v1392
        %1395 = vset.pattern.permute.xlu0 47
        %1396 = vperm.xlu0 %1395, %v341
        %v1397 = vpop.permute.xlu0 %1396
        %v1399 = vlaneseq
        %v1400 = vshrl.u32 %v1399, 7
        %v1401 = vsub.s32 7, %v1400
        %v1402 = vrot.slane %v1281, %v1401
        %v1403 = vlaneseq
        %v1404 = vshrl.u32 %v1403, 7
        %v1405 = vsub.s32 7, %v1404
        %v1406 = vrot.slane %v1282, %v1405
        %v1407 = vmul.f32 %v1397, %v1402
        %v1408 = vmul.f32 %v1397, %v1406
        %v1409 = vadd.f32 %v1393, %v1407
        %v1410 = vadd.f32 %v1394, %v1408
        %1411 = vrot.lane.b32.xlu0 %v600, 113
        %v1412 = vpop.permute.xlu0 %1411
        %1413 = vrot.lane.b32.xlu0 %v601, 113
        %v1414 = vpop.permute.xlu0 %1413
        %v1415 = vsel %vm506, %v1412, %v1414
        %v1416 = vsel %vm506, %v1414, %v1412
        %v1417 = vmul.f32 %v1415, %v515
        %v1418 = vmul.f32 %v1416, %v519
        %1419 = vset.pattern.permute.xlu0 48
        %1420 = vperm.xlu0 %1419, %v341
        %v1421 = vpop.permute.xlu0 %1420
        %v1423 = vlaneseq
        %v1424 = vshrl.u32 %v1423, 7
        %v1425 = vsub.s32 0, %v1424
        %v1426 = vrot.slane %v1417, %v1425
        %v1427 = vlaneseq
        %v1428 = vshrl.u32 %v1427, 7
        %v1429 = vsub.s32 0, %v1428
        %v1430 = vrot.slane %v1418, %v1429
        %v1431 = vmul.f32 %v1421, %v1426
        %v1432 = vmul.f32 %v1421, %v1430
        %v1433 = vadd.f32 %v1409, %v1431
        %v1434 = vadd.f32 %v1410, %v1432
        %1435 = vset.pattern.permute.xlu0 49
        %1436 = vperm.xlu0 %1435, %v341
        %v1437 = vpop.permute.xlu0 %1436
        %v1439 = vlaneseq
        %v1440 = vshrl.u32 %v1439, 7
        %v1441 = vsub.s32 1, %v1440
        %v1442 = vrot.slane %v1417, %v1441
        %v1443 = vlaneseq
        %v1444 = vshrl.u32 %v1443, 7
        %v1445 = vsub.s32 1, %v1444
        %v1446 = vrot.slane %v1418, %v1445
        %v1447 = vmul.f32 %v1437, %v1442
        %v1448 = vmul.f32 %v1437, %v1446
        %v1449 = vadd.f32 %v1433, %v1447
        %v1450 = vadd.f32 %v1434, %v1448
        %1451 = vset.pattern.permute.xlu0 50
        %1452 = vperm.xlu0 %1451, %v341
        %v1453 = vpop.permute.xlu0 %1452
        %v1455 = vlaneseq
        %v1456 = vshrl.u32 %v1455, 7
        %v1457 = vsub.s32 2, %v1456
        %v1458 = vrot.slane %v1417, %v1457
        %v1459 = vlaneseq
        %v1460 = vshrl.u32 %v1459, 7
        %v1461 = vsub.s32 2, %v1460
        %v1462 = vrot.slane %v1418, %v1461
        %v1463 = vmul.f32 %v1453, %v1458
        %v1464 = vmul.f32 %v1453, %v1462
        %v1465 = vadd.f32 %v1449, %v1463
        %v1466 = vadd.f32 %v1450, %v1464
        %1467 = vset.pattern.permute.xlu0 51
        %1468 = vperm.xlu0 %1467, %v341
        %v1469 = vpop.permute.xlu0 %1468
        %v1471 = vlaneseq
        %v1472 = vshrl.u32 %v1471, 7
        %v1473 = vsub.s32 3, %v1472
        %v1474 = vrot.slane %v1417, %v1473
        %v1475 = vlaneseq
        %v1476 = vshrl.u32 %v1475, 7
        %v1477 = vsub.s32 3, %v1476
        %v1478 = vrot.slane %v1418, %v1477
        %v1479 = vmul.f32 %v1469, %v1474
        %v1480 = vmul.f32 %v1469, %v1478
        %v1481 = vadd.f32 %v1465, %v1479
        %v1482 = vadd.f32 %v1466, %v1480
        %1483 = vset.pattern.permute.xlu0 52
        %1484 = vperm.xlu0 %1483, %v341
        %v1485 = vpop.permute.xlu0 %1484
        %v1487 = vlaneseq
        %v1488 = vshrl.u32 %v1487, 7
        %v1489 = vsub.s32 4, %v1488
        %v1490 = vrot.slane %v1417, %v1489
        %v1491 = vlaneseq
        %v1492 = vshrl.u32 %v1491, 7
        %v1493 = vsub.s32 4, %v1492
        %v1494 = vrot.slane %v1418, %v1493
        %v1495 = vmul.f32 %v1485, %v1490
        %v1496 = vmul.f32 %v1485, %v1494
        %v1497 = vadd.f32 %v1481, %v1495
        %v1498 = vadd.f32 %v1482, %v1496
        %1499 = vset.pattern.permute.xlu0 53
        %1500 = vperm.xlu0 %1499, %v341
        %v1501 = vpop.permute.xlu0 %1500
        %v1503 = vlaneseq
        %v1504 = vshrl.u32 %v1503, 7
        %v1505 = vsub.s32 5, %v1504
        %v1506 = vrot.slane %v1417, %v1505
        %v1507 = vlaneseq
        %v1508 = vshrl.u32 %v1507, 7
        %v1509 = vsub.s32 5, %v1508
        %v1510 = vrot.slane %v1418, %v1509
        %v1511 = vmul.f32 %v1501, %v1506
        %v1512 = vmul.f32 %v1501, %v1510
        %v1513 = vadd.f32 %v1497, %v1511
        %v1514 = vadd.f32 %v1498, %v1512
        %1515 = vset.pattern.permute.xlu0 54
        %1516 = vperm.xlu0 %1515, %v341
        %v1517 = vpop.permute.xlu0 %1516
        %v1519 = vlaneseq
        %v1520 = vshrl.u32 %v1519, 7
        %v1521 = vsub.s32 6, %v1520
        %v1522 = vrot.slane %v1417, %v1521
        %v1523 = vlaneseq
        %v1524 = vshrl.u32 %v1523, 7
        %v1525 = vsub.s32 6, %v1524
        %v1526 = vrot.slane %v1418, %v1525
        %v1527 = vmul.f32 %v1517, %v1522
        %v1528 = vmul.f32 %v1517, %v1526
        %v1529 = vadd.f32 %v1513, %v1527
        %v1530 = vadd.f32 %v1514, %v1528
        %1531 = vset.pattern.permute.xlu0 55
        %1532 = vperm.xlu0 %1531, %v341
        %v1533 = vpop.permute.xlu0 %1532
        %v1535 = vlaneseq
        %v1536 = vshrl.u32 %v1535, 7
        %v1537 = vsub.s32 7, %v1536
        %v1538 = vrot.slane %v1417, %v1537
        %v1539 = vlaneseq
        %v1540 = vshrl.u32 %v1539, 7
        %v1541 = vsub.s32 7, %v1540
        %v1542 = vrot.slane %v1418, %v1541
        %v1543 = vmul.f32 %v1533, %v1538
        %v1544 = vmul.f32 %v1533, %v1542
        %v1545 = vadd.f32 %v1529, %v1543
        %v1546 = vadd.f32 %v1530, %v1544
        %1547 = vrot.lane.b32.xlu0 %v600, 112
        %v1548 = vpop.permute.xlu0 %1547
        %1549 = vrot.lane.b32.xlu0 %v601, 112
        %v1550 = vpop.permute.xlu0 %1549
        %v1551 = vsel %vm536, %v1548, %v1550
        %v1552 = vsel %vm536, %v1550, %v1548
        %v1553 = vmul.f32 %v1551, %v545
        %v1554 = vmul.f32 %v1552, %v549
        %1555 = vset.pattern.permute.xlu0 56
        %1556 = vperm.xlu0 %1555, %v341
        %v1557 = vpop.permute.xlu0 %1556
        %v1559 = vlaneseq
        %v1560 = vshrl.u32 %v1559, 7
        %v1561 = vsub.s32 0, %v1560
        %v1562 = vrot.slane %v1553, %v1561
        %v1563 = vlaneseq
        %v1564 = vshrl.u32 %v1563, 7
        %v1565 = vsub.s32 0, %v1564
        %v1566 = vrot.slane %v1554, %v1565
        %v1567 = vmul.f32 %v1557, %v1562
        %v1568 = vmul.f32 %v1557, %v1566
        %v1569 = vadd.f32 %v1545, %v1567
        %v1570 = vadd.f32 %v1546, %v1568
        %1571 = vset.pattern.permute.xlu0 57
        %1572 = vperm.xlu0 %1571, %v341
        %v1573 = vpop.permute.xlu0 %1572
        %v1575 = vlaneseq
        %v1576 = vshrl.u32 %v1575, 7
        %v1577 = vsub.s32 1, %v1576
        %v1578 = vrot.slane %v1553, %v1577
        %v1579 = vlaneseq
        %v1580 = vshrl.u32 %v1579, 7
        %v1581 = vsub.s32 1, %v1580
        %v1582 = vrot.slane %v1554, %v1581
        %v1583 = vmul.f32 %v1573, %v1578
        %v1584 = vmul.f32 %v1573, %v1582
        %v1585 = vadd.f32 %v1569, %v1583
        %v1586 = vadd.f32 %v1570, %v1584
        %1587 = vset.pattern.permute.xlu0 58
        %1588 = vperm.xlu0 %1587, %v341
        %v1589 = vpop.permute.xlu0 %1588
        %v1591 = vlaneseq
        %v1592 = vshrl.u32 %v1591, 7
        %v1593 = vsub.s32 2, %v1592
        %v1594 = vrot.slane %v1553, %v1593
        %v1595 = vlaneseq
        %v1596 = vshrl.u32 %v1595, 7
        %v1597 = vsub.s32 2, %v1596
        %v1598 = vrot.slane %v1554, %v1597
        %v1599 = vmul.f32 %v1589, %v1594
        %v1600 = vmul.f32 %v1589, %v1598
        %v1601 = vadd.f32 %v1585, %v1599
        %v1602 = vadd.f32 %v1586, %v1600
        %1603 = vset.pattern.permute.xlu0 59
        %1604 = vperm.xlu0 %1603, %v341
        %v1605 = vpop.permute.xlu0 %1604
        %v1607 = vlaneseq
        %v1608 = vshrl.u32 %v1607, 7
        %v1609 = vsub.s32 3, %v1608
        %v1610 = vrot.slane %v1553, %v1609
        %v1611 = vlaneseq
        %v1612 = vshrl.u32 %v1611, 7
        %v1613 = vsub.s32 3, %v1612
        %v1614 = vrot.slane %v1554, %v1613
        %v1615 = vmul.f32 %v1605, %v1610
        %v1616 = vmul.f32 %v1605, %v1614
        %v1617 = vadd.f32 %v1601, %v1615
        %v1618 = vadd.f32 %v1602, %v1616
        %1619 = vset.pattern.permute.xlu0 60
        %1620 = vperm.xlu0 %1619, %v341
        %v1621 = vpop.permute.xlu0 %1620
        %v1623 = vlaneseq
        %v1624 = vshrl.u32 %v1623, 7
        %v1625 = vsub.s32 4, %v1624
        %v1626 = vrot.slane %v1553, %v1625
        %v1627 = vlaneseq
        %v1628 = vshrl.u32 %v1627, 7
        %v1629 = vsub.s32 4, %v1628
        %v1630 = vrot.slane %v1554, %v1629
        %v1631 = vmul.f32 %v1621, %v1626
        %v1632 = vmul.f32 %v1621, %v1630
        %v1633 = vadd.f32 %v1617, %v1631
        %v1634 = vadd.f32 %v1618, %v1632
        %1635 = vset.pattern.permute.xlu0 61
        %1636 = vperm.xlu0 %1635, %v341
        %v1637 = vpop.permute.xlu0 %1636
        %v1639 = vlaneseq
        %v1640 = vshrl.u32 %v1639, 7
        %v1641 = vsub.s32 5, %v1640
        %v1642 = vrot.slane %v1553, %v1641
        %v1643 = vlaneseq
        %v1644 = vshrl.u32 %v1643, 7
        %v1645 = vsub.s32 5, %v1644
        %v1646 = vrot.slane %v1554, %v1645
        %v1647 = vmul.f32 %v1637, %v1642
        %v1648 = vmul.f32 %v1637, %v1646
        %v1649 = vadd.f32 %v1633, %v1647
        %v1650 = vadd.f32 %v1634, %v1648
        %1651 = vset.pattern.permute.xlu0 62
        %1652 = vperm.xlu0 %1651, %v341
        %v1653 = vpop.permute.xlu0 %1652
        %v1655 = vlaneseq
        %v1656 = vshrl.u32 %v1655, 7
        %v1657 = vsub.s32 6, %v1656
        %v1658 = vrot.slane %v1553, %v1657
        %v1659 = vlaneseq
        %v1660 = vshrl.u32 %v1659, 7
        %v1661 = vsub.s32 6, %v1660
        %v1662 = vrot.slane %v1554, %v1661
        %v1663 = vmul.f32 %v1653, %v1658
        %v1664 = vmul.f32 %v1653, %v1662
        %v1665 = vadd.f32 %v1649, %v1663
        %v1666 = vadd.f32 %v1650, %v1664
        %1667 = vset.pattern.permute.xlu0 63
        %1668 = vperm.xlu0 %1667, %v341
        %v1669 = vpop.permute.xlu0 %1668
        %v1671 = vlaneseq
        %v1672 = vshrl.u32 %v1671, 7
        %v1673 = vsub.s32 7, %v1672
        %v1674 = vrot.slane %v1553, %v1673
        %v1675 = vlaneseq
        %v1676 = vshrl.u32 %v1675, 7
        %v1677 = vsub.s32 7, %v1676
        %v1678 = vrot.slane %v1554, %v1677
        %v1679 = vmul.f32 %v1669, %v1674
        %v1680 = vmul.f32 %v1669, %v1678
        %v1681 = vadd.f32 %v1665, %v1679
        %v1682 = vadd.f32 %v1666, %v1680
        %1683 = vrot.lane.b32.xlu0 %v600, 111
        %v1684 = vpop.permute.xlu0 %1683
        %1685 = vrot.lane.b32.xlu0 %v601, 111
        %v1686 = vpop.permute.xlu0 %1685
        %v1687 = vsel %vm566, %v1684, %v1686
        %v1688 = vsel %vm566, %v1686, %v1684
        %v1689 = vmul.f32 %v1687, %v575
        %v1690 = vmul.f32 %v1688, %v579
        %1691 = vset.pattern.permute.xlu0 64
        %1692 = vperm.xlu0 %1691, %v341
        %v1693 = vpop.permute.xlu0 %1692
        %v1695 = vlaneseq
        %v1696 = vshrl.u32 %v1695, 7
        %v1697 = vsub.s32 0, %v1696
        %v1698 = vrot.slane %v1689, %v1697
        %v1699 = vlaneseq
        %v1700 = vshrl.u32 %v1699, 7
        %v1701 = vsub.s32 0, %v1700
        %v1702 = vrot.slane %v1690, %v1701
        %v1703 = vmul.f32 %v1693, %v1698
        %v1704 = vmul.f32 %v1693, %v1702
        %v1705 = vadd.f32 %v1681, %v1703
        %v1706 = vadd.f32 %v1682, %v1704
        %1707 = vset.pattern.permute.xlu0 65
        %1708 = vperm.xlu0 %1707, %v341
        %v1709 = vpop.permute.xlu0 %1708
        %v1711 = vlaneseq
        %v1712 = vshrl.u32 %v1711, 7
        %v1713 = vsub.s32 1, %v1712
        %v1714 = vrot.slane %v1689, %v1713
        %v1715 = vlaneseq
        %v1716 = vshrl.u32 %v1715, 7
        %v1717 = vsub.s32 1, %v1716
        %v1718 = vrot.slane %v1690, %v1717
        %v1719 = vmul.f32 %v1709, %v1714
        %v1720 = vmul.f32 %v1709, %v1718
        %v1721 = vadd.f32 %v1705, %v1719
        %v1722 = vadd.f32 %v1706, %v1720
        %1723 = vset.pattern.permute.xlu0 66
        %1724 = vperm.xlu0 %1723, %v341
        %v1725 = vpop.permute.xlu0 %1724
        %v1727 = vlaneseq
        %v1728 = vshrl.u32 %v1727, 7
        %v1729 = vsub.s32 2, %v1728
        %v1730 = vrot.slane %v1689, %v1729
        %v1731 = vlaneseq
        %v1732 = vshrl.u32 %v1731, 7
        %v1733 = vsub.s32 2, %v1732
        %v1734 = vrot.slane %v1690, %v1733
        %v1735 = vmul.f32 %v1725, %v1730
        %v1736 = vmul.f32 %v1725, %v1734
        %v1737 = vadd.f32 %v1721, %v1735
        %v1738 = vadd.f32 %v1722, %v1736
        %1739 = vset.pattern.permute.xlu0 67
        %1740 = vperm.xlu0 %1739, %v341
        %v1741 = vpop.permute.xlu0 %1740
        %v1743 = vlaneseq
        %v1744 = vshrl.u32 %v1743, 7
        %v1745 = vsub.s32 3, %v1744
        %v1746 = vrot.slane %v1689, %v1745
        %v1747 = vlaneseq
        %v1748 = vshrl.u32 %v1747, 7
        %v1749 = vsub.s32 3, %v1748
        %v1750 = vrot.slane %v1690, %v1749
        %v1751 = vmul.f32 %v1741, %v1746
        %v1752 = vmul.f32 %v1741, %v1750
        %v1753 = vadd.f32 %v1737, %v1751
        %v1754 = vadd.f32 %v1738, %v1752
        %1755 = vset.pattern.permute.xlu0 68
        %1756 = vperm.xlu0 %1755, %v341
        %v1757 = vpop.permute.xlu0 %1756
        %v1759 = vlaneseq
        %v1760 = vshrl.u32 %v1759, 7
        %v1761 = vsub.s32 4, %v1760
        %v1762 = vrot.slane %v1689, %v1761
        %v1763 = vlaneseq
        %v1764 = vshrl.u32 %v1763, 7
        %v1765 = vsub.s32 4, %v1764
        %v1766 = vrot.slane %v1690, %v1765
        %v1767 = vmul.f32 %v1757, %v1762
        %v1768 = vmul.f32 %v1757, %v1766
        %v1769 = vadd.f32 %v1753, %v1767
        %v1770 = vadd.f32 %v1754, %v1768
        %1771 = vset.pattern.permute.xlu0 69
        %1772 = vperm.xlu0 %1771, %v341
        %v1773 = vpop.permute.xlu0 %1772
        %v1775 = vlaneseq
        %v1776 = vshrl.u32 %v1775, 7
        %v1777 = vsub.s32 5, %v1776
        %v1778 = vrot.slane %v1689, %v1777
        %v1779 = vlaneseq
        %v1780 = vshrl.u32 %v1779, 7
        %v1781 = vsub.s32 5, %v1780
        %v1782 = vrot.slane %v1690, %v1781
        %v1783 = vmul.f32 %v1773, %v1778
        %v1784 = vmul.f32 %v1773, %v1782
        %v1785 = vadd.f32 %v1769, %v1783
        %v1786 = vadd.f32 %v1770, %v1784
        %1787 = vset.pattern.permute.xlu0 70
        %1788 = vperm.xlu0 %1787, %v341
        %v1789 = vpop.permute.xlu0 %1788
        %v1791 = vlaneseq
        %v1792 = vshrl.u32 %v1791, 7
        %v1793 = vsub.s32 6, %v1792
        %v1794 = vrot.slane %v1689, %v1793
        %v1795 = vlaneseq
        %v1796 = vshrl.u32 %v1795, 7
        %v1797 = vsub.s32 6, %v1796
        %v1798 = vrot.slane %v1690, %v1797
        %v1799 = vmul.f32 %v1789, %v1794
        %v1800 = vmul.f32 %v1789, %v1798
        %v1801 = vadd.f32 %v1785, %v1799
        %v1802 = vadd.f32 %v1786, %v1800
        %1803 = vset.pattern.permute.xlu0 71
        %1804 = vperm.xlu0 %1803, %v341
        %v1805 = vpop.permute.xlu0 %1804
        %v1807 = vlaneseq
        %v1808 = vshrl.u32 %v1807, 7
        %v1809 = vsub.s32 7, %v1808
        %v1810 = vrot.slane %v1689, %v1809
        %v1811 = vlaneseq
        %v1812 = vshrl.u32 %v1811, 7
        %v1813 = vsub.s32 7, %v1812
        %v1814 = vrot.slane %v1690, %v1813
        %v1815 = vmul.f32 %v1805, %v1810
        %v1816 = vmul.f32 %v1805, %v1814
        %v1817 = vadd.f32 %v1801, %v1815
        %v1818 = vadd.f32 %v1802, %v1816
        %v1819 = vld [vmem:[%s6] sm:$0xff]
        %1821 = vset.pattern.permute.xlu0 0
        %1822 = vperm.xlu0 %1821, %v1819
        %v1823 = vpop.permute.xlu0 %1822
        %v1825 = vadd.f32 %v1817, %v1823
        %v1826 = vadd.f32 %v1818, %v1823
        %1827 = vst [vmem:[%s321] sm:$0xff] %v1825
        %1828 = vst [vmem:[%s321 + $0x8] sm:$0xff] %v1826
        %s1829 = sand.u32 %s185, 1
        %s1830 = scalar_lea.sflag [#allocation4], %s1829
        %s1831 = sand.u32 %s185, 1
        %s1832 = smul.addr %s1831, 16
        %s1833 = scalar_lea.vmem [#allocation8], %s1832
        // Predicated region
        $region61: #{tpu_custom_call.1} parent=47 // pred_check
          %p1834 = pneg %p195
        $region62: #{tpu_custom_call.1} parent=47 // pred_check_branch
          %1836 = sbr.rel (%p1834) target = $region64
        $region63: #{tpu_custom_call.1} parent=47 // pred_region
          %s1838 = ssub.s32 256, 256
          %1839 = vsyncadd %s1830, %s1838
          %s1840 = smul.addr %s25, 2
          %s1841 = smul.addr %s1840, 128
          %s1842 = scalar_lea.hbm %s7, %s1841
          %s1844 = sshll.u32 %s1833, 4
          %s1845 = int_to_ptr.vmem [resolvable:$true] %s1844
          %1847 = dma.vmem_to_hbm [thread:$0]  %s1845, 256, %s1842, %s1830
        $region64: #{tpu_custom_call.1} parent=47 // pred_fallthru
          _
      $region48: #{tpu_custom_call.1} parent=5 // pred_fallthru
        _
      %p1848 = scmp.le.s32.totalorder 2, %s20
      // Predicated region
      $region65: #{tpu_custom_call.1} parent=5 // pred_check
        %p1849 = pneg %p1848
      $region66: #{tpu_custom_call.1} parent=5 // pred_check_branch
        %1851 = sbr.rel (%p1849) target = $region68
      $region67: #{tpu_custom_call.1} parent=5 // pred_region
        %s1852 = ssub.s32 %s20, 2
        // Predicated region
        $region69: #{tpu_custom_call.1} parent=67 // pred_check
          %p1853 = pneg %p201
        $region70: #{tpu_custom_call.1} parent=67 // pred_check_branch
          %1855 = sbr.rel (%p1853) target = $region72
        $region71: #{tpu_custom_call.1} parent=67 // pred_region
          %s1856 = sand.u32 %s186, 1
          %s1857 = scalar_lea.sflag [#allocation4], %s1856
          %s1858 = sand.u32 %s186, 1
          %s1859 = smul.addr %s1858, 16
          %s1860 = scalar_lea.vmem [#allocation8], %s1859
          %1861 = dma.done %s1857, 256
        $region72: #{tpu_custom_call.1} parent=67 // pred_fallthru
          _
      $region68: #{tpu_custom_call.1} parent=5 // pred_fallthru
        _
    $region6: #{tpu_custom_call.1} parent=1 // loop_footer
      %s24 = sadd.s32 1, %s20
    $region7: #{tpu_custom_call.1} parent=1 // loop_footer_branch
      %19 = sbr.rel target = $region3
    $region8: #{tpu_custom_call.1} parent=1 // loop_exit
      _
    %1862 = vsyncpa [#allocation3], 1
    %s1863 = scalar_lea.sflag [#allocation3], 1
    %1864 = vsyncpa %s1863, 1
    %1865 = vsyncpa [#allocation6], 1
    %1866 = vsyncpa [#allocation4], 1
    %s1867 = scalar_lea.sflag [#allocation4], 1
    %1868 = vsyncpa %s1867, 1

</llo_original>
